<compile_context>
chip_gen: v7x
topology: tpu7x:2x2x1
jax: 0.10.0
libtpu: 0.0.40
codegen_flags: <defaults>
</compile_context>

<pallas_src>
import functools
import math

import jax
import jax.numpy as jnp
from jax.experimental import pallas as pl
from jax.experimental.pallas import tpu as pltpu

_SQRT1_2 = 0.7071067811865476
_VMEM_LIMIT = 56 * 1024 * 1024   # fits CLIP-L fused kernels; < v7x 64 MiB physical


# ----------------------------------------------------------------------------
# In-kernel math helpers (fp32 VPU/EUP math; bf16 only at the MXU boundary).
# ----------------------------------------------------------------------------
def _erf(x):
    # fp32 polynomial erf (Abramowitz & Stegun 7.1.26, |err| < 1.5e-7) so that
    # nn.GELU's exact (erf-based) semantics are reproduced in-kernel.
    # TODO(synk): on v6e/v7x a bf16 or tanh-approx epilogue is cheaper if the
    # checkpoint tolerance allows it (kept exact-erf to match nn.GELU).
    p = 0.3275911
    a1, a2, a3, a4, a5 = (0.254829592, -0.284496736, 1.421413741,
                          -1.453152027, 1.061405429)
    ax = jnp.abs(x)
    t = 1.0 / (1.0 + p * ax)
    poly = ((((a5 * t + a4) * t + a3) * t + a2) * t + a1) * t
    y = 1.0 - poly * jnp.exp(-ax * ax)
    return jnp.where(x < 0, -y, y)


def _gelu_exact(x):
    return 0.5 * x * (1.0 + _erf(x * _SQRT1_2))


def _layernorm(x, g, b, eps=1e-5):
    mu = jnp.mean(x, axis=-1, keepdims=True)
    var = jnp.mean(jnp.square(x - mu), axis=-1, keepdims=True)
    return (x - mu) * jax.lax.rsqrt(var + eps) * g + b


# ----------------------------------------------------------------------------
# BlockSpec helpers.
# ----------------------------------------------------------------------------
def _const_spec(shape):
    """Weight block resident across the whole grid: constant index_map and a
    single buffer (default double-buffering is pure VMEM waste for blocks whose
    index never changes)."""
    idx = lambda *_: (0,) * len(shape)
    buffered = getattr(pl, "Buffered", None)
    if buffered is not None:
        try:
            return pl.BlockSpec(shape, idx, pipeline_mode=buffered(1))
        except TypeError:
            pass
    return pl.BlockSpec(shape, idx)


def _row_tiles(m, tm):
    """Pick a row tile: full array if small, else a multiple of 8."""
    if m <= tm:
        return m, 1
    tm = max(8, (tm // 8) * 8)
    return tm, pl.cdiv(m, tm)


def _pick_hidden_chunk(hidden, target=512):
    """Largest 128-aligned chunk <= target that divides the hidden dim."""
    if hidden <= target:
        return hidden
    for c in range(target, 127, -128):
        if hidden % c == 0 and c % 128 == 0:
            return c
    return hidden


# ----------------------------------------------------------------------------
# Kernels
# ----------------------------------------------------------------------------
def _stem_kernel(patch_ref, w_ref, cls_ref, pos_ref, g_ref, b_ref, o_ref):
    # patch: [1, n, K] bf16, w: [K, E] bf16, cls/g/b: [1, E] f32, pos: [S, E] f32
    pe = jnp.dot(patch_ref[0], w_ref[...],
                 preferred_element_type=jnp.float32)            # [n, E] fp32
    tok = jnp.concatenate([cls_ref[...], pe], axis=0) + pos_ref[...]
    # One aligned, lane-dense [S, E] store (no offset-by-1 sublane slices).
    o_ref[0] = _layernorm(tok, g_ref[...], b_ref[...])


def _attn_block_kernel(x_ref, g_ref, b_ref, wqkv_ref, bqkv_ref, wo_ref, bo_ref,
                       o_ref, *, heads, dh):
    # Fused: ln1 -> QKV (one wide matmul) -> per-head attention -> out_proj ->
    # residual add.  Everything stays in VMEM; one lane-dense [S, E] store.
    x = x_ref[0]                                                # [S, E] fp32
    y = _layernorm(x, g_ref[...], b_ref[...]).astype(jnp.bfloat16)
    qkv = (jnp.dot(y, wqkv_ref[...], preferred_element_type=jnp.float32)
           + bqkv_ref[...]).astype(jnp.bfloat16)                # [S, 3E]
    e = heads * dh
    outs = []
    for h in range(heads):
        lo = h * dh
        qh = qkv[:, lo:lo + dh]                 # q already carries 1/sqrt(dh)
        kh = qkv[:, e + lo:e + lo + dh]
        vh = qkv[:, 2 * e + lo:2 * e + lo + dh]
        s = jax.lax.dot_general(qh, kh, (((1,), (1,)), ((), ())),
                                preferred_element_type=jnp.float32)   # [S, S]
        m = jnp.max(s, axis=-1, keepdims=True)
        p = jnp.exp(s - m)
        inv = pl.reciprocal(jnp.sum(p, axis=-1, keepdims=True), approx=True)
        # Deferred normalization: scale the [S, dh] output, not the [S, S] probs.
        oh = jnp.dot(p.astype(jnp.bfloat16), vh,
                     preferred_element_type=jnp.float32) * inv
        outs.append(oh.astype(jnp.bfloat16))
    attn = jnp.concatenate(outs, axis=-1)                       # [S, E] bf16
    out = jnp.dot(attn, wo_ref[...], preferred_element_type=jnp.float32)
    o_ref[0] = x + out + bo_ref[...]


def _mlp_block_kernel(x_ref, g_ref, b_ref, wfc_ref, bfc_ref, wcp_ref, bcp_ref,
                      o_ref, *, n_chunks, chunk):
    # Fused: ln2 -> c_fc -> exact-erf GELU -> c_proj -> residual add, with the
    # 4E hidden dim streamed in 128-aligned chunks (no HBM hidden round trip).
    x = x_ref[...]                                              # [tm, E] fp32
    y = _layernorm(x, g_ref[...], b_ref[...]).astype(jnp.bfloat16)
    acc = x + bcp_ref[...]
    for c in range(n_chunks):
        lo = c * chunk
        h = (jnp.dot(y, wfc_ref[:, lo:lo + chunk],
                     preferred_element_type=jnp.float32)
             + bfc_ref[:, lo:lo + chunk])
        h = _gelu_exact(h).astype(jnp.bfloat16)
        acc = acc + jnp.dot(h, wcp_ref[lo:lo + chunk, :],
                            preferred_element_type=jnp.float32)
    o_ref[...] = acc


def _ln_proj_kernel(x_ref, g_ref, b_ref, w_ref, o_ref):
    # Fused ln_post (on CLS token) -> final projection.
    y = _layernorm(x_ref[...], g_ref[...], b_ref[...]).astype(jnp.bfloat16)
    o_ref[...] = jnp.dot(y, w_ref[...], preferred_element_type=jnp.float32)


# ----------------------------------------------------------------------------
# Wrappers (grids + BlockSpecs).
# ----------------------------------------------------------------------------
def pallas_stem(patches, w, cls, pos, g, b):
    bsz, n, k = patches.shape
    e = w.shape[1]
    s = n + 1
    return pl.pallas_call(
        _stem_kernel,
        grid=(bsz,),
        in_specs=[pl.BlockSpec((1, n, k), lambda i: (i, 0, 0)),
                  _const_spec((k, e)),
                  _const_spec((1, e)),
                  _const_spec((s, e)),
                  _const_spec((1, e)),
                  _const_spec((1, e))],
        out_specs=pl.BlockSpec((1, s, e), lambda i: (i, 0, 0)),
        out_shape=jax.ShapeDtypeStruct((bsz, s, e), jnp.float32),
        compiler_params=pltpu.CompilerParams(
            dimension_semantics=("parallel",),
            vmem_limit_bytes=_VMEM_LIMIT),
    )(patches, w, cls, pos, g, b)


def pallas_attention_block(x, g, b, w_qkv, b_qkv, wo, bo, heads):
    bsz, s, e = x.shape
    dh = e // heads
    row = pl.BlockSpec((1, s, e), lambda i: (i, 0, 0))
    return pl.pallas_call(
        functools.partial(_attn_block_kernel, heads=heads, dh=dh),
        grid=(bsz,),
        in_specs=[row,
                  _const_spec((1, e)), _const_spec((1, e)),
                  _const_spec((e, 3 * e)), _const_spec((1, 3 * e)),
                  _const_spec((e, e)), _const_spec((1, e))],
        out_specs=row,
        out_shape=jax.ShapeDtypeStruct((bsz, s, e), jnp.float32),
        compiler_params=pltpu.CompilerParams(
            dimension_semantics=("parallel",),
            vmem_limit_bytes=_VMEM_LIMIT),
    )(x, g, b, w_qkv, b_qkv, wo, bo)


def pallas_mlp_block(x, g, b, w_fc, b_fc, w_cp, b_cp, *, tm=256):
    m, e = x.shape
    hidden = w_fc.shape[1]
    tm, gm = _row_tiles(m, tm)
    chunk = _pick_hidden_chunk(hidden)
    row = pl.BlockSpec((tm, e), lambda i: (i, 0))
    return pl.pallas_call(
        functools.partial(_mlp_block_kernel,
                          n_chunks=hidden // chunk, chunk=chunk),
        grid=(gm,),
        in_specs=[row,
                  _const_spec((1, e)), _const_spec((1, e)),
                  _const_spec((e, hidden)), _const_spec((1, hidden)),
                  _const_spec((hidden, e)), _const_spec((1, e))],
        out_specs=row,
        out_shape=jax.ShapeDtypeStruct((m, e), jnp.float32),
        compiler_params=pltpu.CompilerParams(
            dimension_semantics=("parallel",),
            vmem_limit_bytes=_VMEM_LIMIT),
    )(x, g, b, w_fc, b_fc, w_cp, b_cp)


def pallas_ln_proj(x, g, b, w):
    m, _ = x.shape
    d = w.shape[1]
    return pl.pallas_call(
        _ln_proj_kernel,
        out_shape=jax.ShapeDtypeStruct((m, d), jnp.float32),
        compiler_params=pltpu.CompilerParams(vmem_limit_bytes=_VMEM_LIMIT),
    )(x, g, b, w)


# ----------------------------------------------------------------------------
# Parameters (deterministic synthetic init, shapes from the PyTorch __init__),
# plus a one-time "prepare" step that pre-transposes / pre-scales / pre-concats
# / bf16-casts all matmul weights so nothing is reshaped on the hot path.
# ----------------------------------------------------------------------------
def init_params(key, *, image_size, patch_size, width, layers, mlp_ratio,
                output_dim):
    grid = image_size // patch_size
    n_tok = grid * grid + 1
    mlp_width = int(width * mlp_ratio)
    scale = width ** -0.5

    keys = jax.random.split(key, 4 + layers)

    def nrm(k, shape, s=0.02):
        return (s * jax.random.normal(k, shape)).astype(jnp.float32)

    params = {
        "conv_w": nrm(keys[0], (width, 3, patch_size, patch_size)),
        "class_embedding": (scale * jax.random.normal(keys[1], (width,))
                            ).astype(jnp.float32),
        "pos_embedding": (scale * jax.random.normal(keys[2], (n_tok, width))
                          ).astype(jnp.float32),
        "ln_pre_g": jnp.ones((width,), jnp.float32),
        "ln_pre_b": jnp.zeros((width,), jnp.float32),
        "ln_post_g": jnp.ones((width,), jnp.float32),
        "ln_post_b": jnp.zeros((width,), jnp.float32),
        "proj": (scale * jax.random.normal(keys[3], (width, output_dim))
                 ).astype(jnp.float32),
        "blocks": [],
    }
    for layer in range(layers):
        ks = jax.random.split(keys[4 + layer], 6)
        params["blocks"].append({
            "ln1_g": jnp.ones((width,), jnp.float32),
            "ln1_b": jnp.zeros((width,), jnp.float32),
            "in_proj_w": nrm(ks[0], (3 * width, width)),   # [3E, E] like torch
            "in_proj_b": nrm(ks[1], (3 * width,)),
            "out_proj_w": nrm(ks[2], (width, width)),      # [E, E]
            "out_proj_b": jnp.zeros((width,), jnp.float32),
            "ln2_g": jnp.ones((width,), jnp.float32),
            "ln2_b": jnp.zeros((width,), jnp.float32),
            "fc_w": nrm(ks[3], (mlp_width, width)),        # [hidden, E]
            "fc_b": nrm(ks[4], (mlp_width,)),
            "cproj_w": nrm(ks[5], (width, mlp_width)),     # [E, hidden]
            "cproj_b": jnp.zeros((width,), jnp.float32),
        })
    return params


def prepare_params(params, heads):
    """One-time: transpose weights to [in, out], concat Wq|Wk|Wv into [E,3E],
    fold the 1/sqrt(dh) attention scale into the q columns, cast matmul weights
    to bf16, reshape biases / LN params to [1, N]."""
    e = params["conv_w"].shape[0]
    dh = e // heads
    scale = 1.0 / math.sqrt(dh)
    bf = jnp.bfloat16
    prep = {
        "conv_w": params["conv_w"].reshape(e, -1).T.astype(bf),   # [C*p*p, E]
        "cls": params["class_embedding"].reshape(1, e),
        "pos": params["pos_embedding"],                            # [S, E]
        "ln_pre_g": params["ln_pre_g"].reshape(1, e),
        "ln_pre_b": params["ln_pre_b"].reshape(1, e),
        "ln_post_g": params["ln_post_g"].reshape(1, e),
        "ln_post_b": params["ln_post_b"].reshape(1, e),
        "proj": params["proj"].astype(bf),                         # [E, D]
        "blocks": [],
    }
    for blk in params["blocks"]:
        w_in = blk["in_proj_w"]   # [3E, E]
        b_in = blk["in_proj_b"]
        mlp = blk["fc_w"].shape[0]
        wq = w_in[0:e].T * scale
        wk = w_in[e:2 * e].T
        wv = w_in[2 * e:3 * e].T
        bq = b_in[0:e] * scale
        bk = b_in[e:2 * e]
        bv = b_in[2 * e:3 * e]
        prep["blocks"].append({
            "ln1_g": blk["ln1_g"].reshape(1, e),
            "ln1_b": blk["ln1_b"].reshape(1, e),
            "w_qkv": jnp.concatenate([wq, wk, wv], axis=1).astype(bf),  # [E,3E]
            "b_qkv": jnp.concatenate([bq, bk, bv]).reshape(1, 3 * e),
            "wo": blk["out_proj_w"].T.astype(bf),                       # [E, E]
            "bo": blk["out_proj_b"].reshape(1, e),
            "ln2_g": blk["ln2_g"].reshape(1, e),
            "ln2_b": blk["ln2_b"].reshape(1, e),
            "w_fc": blk["fc_w"].T.astype(bf),                           # [E, 4E]
            "b_fc": blk["fc_b"].reshape(1, mlp),
            "w_cproj": blk["cproj_w"].T.astype(bf),                     # [4E, E]
            "b_cproj": blk["cproj_b"].reshape(1, e),
        })
    return prep


# ----------------------------------------------------------------------------
# Forward pass (== CLIPVisionTransformer.forward / VisualTransformer.forward).
# ----------------------------------------------------------------------------
def clip_vision_forward(prep, image, *, patch_size, heads, tm=256):
    b, c, h, w = image.shape
    p = patch_size
    hg, wg = h // p, w // p
    n = hg * wg
    e = prep["conv_w"].shape[1]
    s_len = n + 1

    # conv1 (stride == kernel == patch) <=> patch unfold + matmul.
    patches = image.reshape(b, c, hg, p, wg, p).transpose(0, 2, 4, 1, 3, 5)
    patches = patches.reshape(b, n, c * p * p).astype(jnp.bfloat16)

    # Fused stem: patch matmul + cls token + positional embedding + ln_pre.
    x = pallas_stem(patches, prep["conv_w"], prep["cls"], prep["pos"],
                    prep["ln_pre_g"], prep["ln_pre_b"])          # [B,S,E] f32

    # Transformer resblocks: x = x + attn(ln1(x)); x = x + mlp(ln2(x)).
    for blk in prep["blocks"]:
        x = pallas_attention_block(x, blk["ln1_g"], blk["ln1_b"],
                                   blk["w_qkv"], blk["b_qkv"],
                                   blk["wo"], blk["bo"], heads)  # [B,S,E] f32
        x2d = pallas_mlp_block(x.reshape(b * s_len, e),
                               blk["ln2_g"], blk["ln2_b"],
                               blk["w_fc"], blk["b_fc"],
                               blk["w_cproj"], blk["b_cproj"], tm=tm)
        x = x2d.reshape(b, s_len, e)

    # ln_post on CLS token, then final projection (fused kernel).
    cls_out = x[:, 0, :]
    return pallas_ln_proj(cls_out, prep["ln_post_g"], prep["ln_post_b"],
                          prep["proj"])


if __name__ == "__main__":
    # Small config: image 16x16, patch 8 -> 2x2 grid, S = 5 tokens,
    # width 32, head_width 16 -> 2 heads, 2 layers, mlp_ratio 4, embed_dim 16.
    image_size, patch_size = 16, 8
    width, layers, head_width, mlp_ratio = 32, 2, 16, 4.0
    embed_dim = 16
    heads = width // head_width

    key = jax.random.PRNGKey(0)
    pkey, xkey = jax.random.split(key)
    raw_params = init_params(pkey, image_size=image_size,
                             patch_size=patch_size, width=width,
                             layers=layers, mlp_ratio=mlp_ratio,
                             output_dim=embed_dim)
    prep_params = prepare_params(raw_params, heads)
    image = jax.random.normal(xkey, (2, 3, image_size, image_size),
                              dtype=jnp.float32)

    fwd = jax.jit(functools.partial(clip_vision_forward,
                                    patch_size=patch_size, heads=heads))
    out = fwd(prep_params, image)
    jax.block_until_ready(out)
    assert out.shape == (2, embed_dim) and out.dtype == jnp.float32
    print("KERNEL_OK")
</pallas_src>

<mosaic_0001>
module attributes {stable_mosaic.version = 11 : i64} {
  func.func @_stem_kernel(%arg0: i32, %arg1: memref<1x4x192xbf16, #tpu.memory_space<vmem>>, %arg2: memref<192x32xbf16, #tpu.memory_space<vmem>>, %arg3: memref<1x32xf32, #tpu.memory_space<vmem>>, %arg4: memref<5x32xf32, #tpu.memory_space<vmem>>, %arg5: memref<1x32xf32, #tpu.memory_space<vmem>>, %arg6: memref<1x32xf32, #tpu.memory_space<vmem>>, %arg7: memref<1x5x32xf32, #tpu.memory_space<vmem>>) attributes {dimension_semantics = [#tpu.dimension_semantics<parallel>], iteration_bounds = array<i64: 2>, scalar_prefetch = 0 : i64, scratch_operands = 0 : i64, tpu.core_type = #tpu.core_type<tc>, window_params = [{transform_indices = @transform_0, window_bounds = array<i64: 1, 4, 192>}, {pipeline_mode = #tpu.pipeline_mode<synchronous>, transform_indices = @transform_1, window_bounds = array<i64: 192, 32>}, {pipeline_mode = #tpu.pipeline_mode<synchronous>, transform_indices = @transform_2, window_bounds = array<i64: 1, 32>}, {pipeline_mode = #tpu.pipeline_mode<synchronous>, transform_indices = @transform_3, window_bounds = array<i64: 5, 32>}, {pipeline_mode = #tpu.pipeline_mode<synchronous>, transform_indices = @transform_4, window_bounds = array<i64: 1, 32>}, {pipeline_mode = #tpu.pipeline_mode<synchronous>, transform_indices = @transform_5, window_bounds = array<i64: 1, 32>}, {transform_indices = @transform_6, window_bounds = array<i64: 1, 5, 32>}]} {
    %c0 = arith.constant 0 : index
    %c0_0 = arith.constant 0 : index
    %c0_1 = arith.constant 0 : index
    %0 = vector.load %arg1[%c0, %c0_0, %c0_1] : memref<1x4x192xbf16, #tpu.memory_space<vmem>>, vector<1x4x192xbf16>
    %1 = vector.shape_cast %0 : vector<1x4x192xbf16> to vector<4x192xbf16>
    %c0_2 = arith.constant 0 : index
    %c0_3 = arith.constant 0 : index
    %2 = vector.load %arg2[%c0_2, %c0_3] : memref<192x32xbf16, #tpu.memory_space<vmem>>, vector<192x32xbf16>
    %cst = arith.constant dense<0.000000e+00> : vector<4x32xf32>
    %3 = tpu.matmul %1, %2, %cst {dimension_numbers = #tpu.dot_dimension_numbers<[1], [0], [0], [1], [0, 0, 1, 1], [], []>} : vector<4x192xbf16>, vector<192x32xbf16>, vector<4x32xf32> -> vector<4x32xf32>
    %c0_4 = arith.constant 0 : index
    %c0_5 = arith.constant 0 : index
    %4 = vector.load %arg3[%c0_4, %c0_5] : memref<1x32xf32, #tpu.memory_space<vmem>>, vector<1x32xf32>
    %5 = tpu.concatenate %4, %3 in 0 : vector<1x32xf32>, vector<4x32xf32> -> vector<5x32xf32>
    %c0_6 = arith.constant 0 : index
    %c0_7 = arith.constant 0 : index
    %6 = vector.load %arg4[%c0_6, %c0_7] : memref<5x32xf32, #tpu.memory_space<vmem>>, vector<5x32xf32>
    %7 = arith.addf %5, %6 : vector<5x32xf32>
    %c0_8 = arith.constant 0 : index
    %c0_9 = arith.constant 0 : index
    %8 = vector.load %arg5[%c0_8, %c0_9] : memref<1x32xf32, #tpu.memory_space<vmem>>, vector<1x32xf32>
    %c0_10 = arith.constant 0 : index
    %c0_11 = arith.constant 0 : index
    %9 = vector.load %arg6[%c0_10, %c0_11] : memref<1x32xf32, #tpu.memory_space<vmem>>, vector<1x32xf32>
    %cst_12 = arith.constant dense<0.000000e+00> : vector<5xf32>
    %10 = vector.multi_reduction <add>, %7, %cst_12 [1] : vector<5x32xf32> to vector<5xf32>
    %11 = vector.shape_cast %10 : vector<5xf32> to vector<5x1xf32>
    %cst_13 = arith.constant 3.200000e+01 : f32
    %12 = vector.broadcast %cst_13 : f32 to vector<5x1xf32>
    %13 = arith.divf %11, %12 : vector<5x1xf32>
    %14 = vector.broadcast %13 : vector<5x1xf32> to vector<5x32xf32>
    %15 = arith.subf %7, %14 : vector<5x32xf32>
    %16 = arith.mulf %15, %15 : vector<5x32xf32>
    %cst_14 = arith.constant dense<0.000000e+00> : vector<5xf32>
    %17 = vector.multi_reduction <add>, %16, %cst_14 [1] : vector<5x32xf32> to vector<5xf32>
    %18 = vector.shape_cast %17 : vector<5xf32> to vector<5x1xf32>
    %cst_15 = arith.constant 3.200000e+01 : f32
    %19 = vector.broadcast %cst_15 : f32 to vector<5x1xf32>
    %20 = arith.divf %18, %19 : vector<5x1xf32>
    %21 = vector.broadcast %13 : vector<5x1xf32> to vector<5x32xf32>
    %22 = arith.subf %7, %21 : vector<5x32xf32>
    %cst_16 = arith.constant 9.99999974E-6 : f32
    %23 = vector.broadcast %cst_16 : f32 to vector<5x1xf32>
    %24 = arith.addf %20, %23 : vector<5x1xf32>
    %25 = math.rsqrt %24 : vector<5x1xf32>
    %26 = vector.broadcast %25 : vector<5x1xf32> to vector<5x32xf32>
    %27 = arith.mulf %22, %26 : vector<5x32xf32>
    %28 = vector.broadcast %8 : vector<1x32xf32> to vector<5x32xf32>
    %29 = arith.mulf %27, %28 : vector<5x32xf32>
    %30 = vector.broadcast %9 : vector<1x32xf32> to vector<5x32xf32>
    %31 = arith.addf %29, %30 : vector<5x32xf32>
    %c0_17 = arith.constant 0 : index
    %c0_18 = arith.constant 0 : index
    %c0_19 = arith.constant 0 : index
    %32 = vector.load %arg7[%c0_17, %c0_18, %c0_19] : memref<1x5x32xf32, #tpu.memory_space<vmem>>, vector<1x5x32xf32>
    %33 = vector.shape_cast %32 : vector<1x5x32xf32> to vector<5x32xf32>
    %34 = vector.shape_cast %31 : vector<5x32xf32> to vector<1x5x32xf32>
    tpu.vector_store %arg7[%c0_17, %c0_18, %c0_19], %34 {strides = array<i32>} : memref<1x5x32xf32, #tpu.memory_space<vmem>>, vector<1x5x32xf32>,
    return
  }
  func.func @transform_0(%arg0: i32) -> (i32, i32, i32) {
    %c0_i32 = arith.constant 0 : i32
    %c0_i32_0 = arith.constant 0 : i32
    %c0_i32_1 = arith.constant 0 : i32
    return %arg0, %c0_i32, %c0_i32_0 : i32, i32, i32
  }
  func.func @transform_1(%arg0: i32) -> (i32, i32) {
    %c0_i32 = arith.constant 0 : i32
    %c0_i32_0 = arith.constant 0 : i32
    %c0_i32_1 = arith.constant 0 : i32
    return %c0_i32, %c0_i32_0 : i32, i32
  }
  func.func @transform_2(%arg0: i32) -> (i32, i32) {
    %c0_i32 = arith.constant 0 : i32
    %c0_i32_0 = arith.constant 0 : i32
    %c0_i32_1 = arith.constant 0 : i32
    return %c0_i32, %c0_i32_0 : i32, i32
  }
  func.func @transform_3(%arg0: i32) -> (i32, i32) {
    %c0_i32 = arith.constant 0 : i32
    %c0_i32_0 = arith.constant 0 : i32
    %c0_i32_1 = arith.constant 0 : i32
    return %c0_i32, %c0_i32_0 : i32, i32
  }
  func.func @transform_4(%arg0: i32) -> (i32, i32) {
    %c0_i32 = arith.constant 0 : i32
    %c0_i32_0 = arith.constant 0 : i32
    %c0_i32_1 = arith.constant 0 : i32
    return %c0_i32, %c0_i32_0 : i32, i32
  }
  func.func @transform_5(%arg0: i32) -> (i32, i32) {
    %c0_i32 = arith.constant 0 : i32
    %c0_i32_0 = arith.constant 0 : i32
    %c0_i32_1 = arith.constant 0 : i32
    return %c0_i32, %c0_i32_0 : i32, i32
  }
  func.func @transform_6(%arg0: i32) -> (i32, i32, i32) {
    %c0_i32 = arith.constant 0 : i32
    %c0_i32_0 = arith.constant 0 : i32
    %c0_i32_1 = arith.constant 0 : i32
    return %arg0, %c0_i32, %c0_i32_0 : i32, i32, i32
  }
}

module attributes {stable_mosaic.version = 11 : i64} {
  func.func @_attn_block_kernel(%arg0: i32, %arg1: memref<1x5x32xf32, #tpu.memory_space<vmem>>, %arg2: memref<1x32xf32, #tpu.memory_space<vmem>>, %arg3: memref<1x32xf32, #tpu.memory_space<vmem>>, %arg4: memref<32x96xbf16, #tpu.memory_space<vmem>>, %arg5: memref<1x96xf32, #tpu.memory_space<vmem>>, %arg6: memref<32x32xbf16, #tpu.memory_space<vmem>>, %arg7: memref<1x32xf32, #tpu.memory_space<vmem>>, %arg8: memref<1x5x32xf32, #tpu.memory_space<vmem>>) attributes {dimension_semantics = [#tpu.dimension_semantics<parallel>], iteration_bounds = array<i64: 2>, scalar_prefetch = 0 : i64, scratch_operands = 0 : i64, tpu.core_type = #tpu.core_type<tc>, window_params = [{transform_indices = @transform_0, window_bounds = array<i64: 1, 5, 32>}, {pipeline_mode = #tpu.pipeline_mode<synchronous>, transform_indices = @transform_1, window_bounds = array<i64: 1, 32>}, {pipeline_mode = #tpu.pipeline_mode<synchronous>, transform_indices = @transform_2, window_bounds = array<i64: 1, 32>}, {pipeline_mode = #tpu.pipeline_mode<synchronous>, transform_indices = @transform_3, window_bounds = array<i64: 32, 96>}, {pipeline_mode = #tpu.pipeline_mode<synchronous>, transform_indices = @transform_4, window_bounds = array<i64: 1, 96>}, {pipeline_mode = #tpu.pipeline_mode<synchronous>, transform_indices = @transform_5, window_bounds = array<i64: 32, 32>}, {pipeline_mode = #tpu.pipeline_mode<synchronous>, transform_indices = @transform_6, window_bounds = array<i64: 1, 32>}, {transform_indices = @transform_7, window_bounds = array<i64: 1, 5, 32>}]} {
    %c0 = arith.constant 0 : index
    %c0_0 = arith.constant 0 : index
    %c0_1 = arith.constant 0 : index
    %0 = vector.load %arg1[%c0, %c0_0, %c0_1] : memref<1x5x32xf32, #tpu.memory_space<vmem>>, vector<1x5x32xf32>
    %1 = vector.shape_cast %0 : vector<1x5x32xf32> to vector<5x32xf32>
    %c0_2 = arith.constant 0 : index
    %c0_3 = arith.constant 0 : index
    %2 = vector.load %arg2[%c0_2, %c0_3] : memref<1x32xf32, #tpu.memory_space<vmem>>, vector<1x32xf32>
    %c0_4 = arith.constant 0 : index
    %c0_5 = arith.constant 0 : index
    %3 = vector.load %arg3[%c0_4, %c0_5] : memref<1x32xf32, #tpu.memory_space<vmem>>, vector<1x32xf32>
    %cst = arith.constant dense<0.000000e+00> : vector<5xf32>
    %4 = vector.multi_reduction <add>, %1, %cst [1] : vector<5x32xf32> to vector<5xf32>
    %5 = vector.shape_cast %4 : vector<5xf32> to vector<5x1xf32>
    %cst_6 = arith.constant 3.200000e+01 : f32
    %6 = vector.broadcast %cst_6 : f32 to vector<5x1xf32>
    %7 = arith.divf %5, %6 : vector<5x1xf32>
    %8 = vector.broadcast %7 : vector<5x1xf32> to vector<5x32xf32>
    %9 = arith.subf %1, %8 : vector<5x32xf32>
    %10 = arith.mulf %9, %9 : vector<5x32xf32>
    %cst_7 = arith.constant dense<0.000000e+00> : vector<5xf32>
    %11 = vector.multi_reduction <add>, %10, %cst_7 [1] : vector<5x32xf32> to vector<5xf32>
    %12 = vector.shape_cast %11 : vector<5xf32> to vector<5x1xf32>
    %cst_8 = arith.constant 3.200000e+01 : f32
    %13 = vector.broadcast %cst_8 : f32 to vector<5x1xf32>
    %14 = arith.divf %12, %13 : vector<5x1xf32>
    %15 = vector.broadcast %7 : vector<5x1xf32> to vector<5x32xf32>
    %16 = arith.subf %1, %15 : vector<5x32xf32>
    %cst_9 = arith.constant 9.99999974E-6 : f32
    %17 = vector.broadcast %cst_9 : f32 to vector<5x1xf32>
    %18 = arith.addf %14, %17 : vector<5x1xf32>
    %19 = math.rsqrt %18 : vector<5x1xf32>
    %20 = vector.broadcast %19 : vector<5x1xf32> to vector<5x32xf32>
    %21 = arith.mulf %16, %20 : vector<5x32xf32>
    %22 = vector.broadcast %2 : vector<1x32xf32> to vector<5x32xf32>
    %23 = arith.mulf %21, %22 : vector<5x32xf32>
    %24 = vector.broadcast %3 : vector<1x32xf32> to vector<5x32xf32>
    %25 = arith.addf %23, %24 : vector<5x32xf32>
    %26 = arith.truncf %25 : vector<5x32xf32> to vector<5x32xbf16>
    %c0_10 = arith.constant 0 : index
    %c0_11 = arith.constant 0 : index
    %27 = vector.load %arg4[%c0_10, %c0_11] : memref<32x96xbf16, #tpu.memory_space<vmem>>, vector<32x96xbf16>
    %cst_12 = arith.constant dense<0.000000e+00> : vector<5x96xf32>
    %28 = tpu.matmul %26, %27, %cst_12 {dimension_numbers = #tpu.dot_dimension_numbers<[1], [0], [0], [1], [0, 0, 1, 1], [], []>} : vector<5x32xbf16>, vector<32x96xbf16>, vector<5x96xf32> -> vector<5x96xf32>
    %c0_13 = arith.constant 0 : index
    %c0_14 = arith.constant 0 : index
    %29 = vector.load %arg5[%c0_13, %c0_14] : memref<1x96xf32, #tpu.memory_space<vmem>>, vector<1x96xf32>
    %30 = vector.broadcast %29 : vector<1x96xf32> to vector<5x96xf32>
    %31 = arith.addf %28, %30 : vector<5x96xf32>
    %32 = arith.truncf %31 : vector<5x96xf32> to vector<5x96xbf16>
    %33 = vector.extract_strided_slice %32 {offsets = [0, 0], sizes = [5, 16], strides = [1, 1]} : vector<5x96xbf16> to vector<5x16xbf16>
    %34 = vector.extract_strided_slice %32 {offsets = [0, 32], sizes = [5, 16], strides = [1, 1]} : vector<5x96xbf16> to vector<5x16xbf16>
    %35 = vector.extract_strided_slice %32 {offsets = [0, 64], sizes = [5, 16], strides = [1, 1]} : vector<5x96xbf16> to vector<5x16xbf16>
    %cst_15 = arith.constant dense<0.000000e+00> : vector<5x5xf32>
    %36 = tpu.matmul %33, %34, %cst_15 {dimension_numbers = #tpu.dot_dimension_numbers<[1], [1], [0], [0], [0, 0, 1, 0], [], []>} : vector<5x16xbf16>, vector<5x16xbf16>, vector<5x5xf32> -> vector<5x5xf32>
    %cst_16 = arith.constant dense<0xFF800000> : vector<5xf32>
    %37 = vector.multi_reduction <maximumf>, %36, %cst_16 [1] : vector<5x5xf32> to vector<5xf32>
    %38 = vector.shape_cast %37 : vector<5xf32> to vector<5x1xf32>
    %39 = vector.broadcast %38 : vector<5x1xf32> to vector<5x5xf32>
    %40 = arith.subf %36, %39 : vector<5x5xf32>
    %41 = math.exp %40 : vector<5x5xf32>
    %cst_17 = arith.constant dense<0.000000e+00> : vector<5xf32>
    %42 = vector.multi_reduction <add>, %41, %cst_17 [1] : vector<5x5xf32> to vector<5xf32>
    %43 = vector.shape_cast %42 : vector<5xf32> to vector<5x1xf32>
    %44 = tpu.reciprocal %43 {approx = true} : vector<5x1xf32> -> vector<5x1xf32>
    %45 = arith.truncf %41 : vector<5x5xf32> to vector<5x5xbf16>
    %cst_18 = arith.constant dense<0.000000e+00> : vector<5x16xf32>
    %46 = tpu.matmul %45, %35, %cst_18 {dimension_numbers = #tpu.dot_dimension_numbers<[1], [0], [0], [1], [0, 0, 1, 1], [], []>} : vector<5x5xbf16>, vector<5x16xbf16>, vector<5x16xf32> -> vector<5x16xf32>
    %47 = vector.broadcast %44 : vector<5x1xf32> to vector<5x16xf32>
    %48 = arith.mulf %46, %47 : vector<5x16xf32>
    %49 = arith.truncf %48 : vector<5x16xf32> to vector<5x16xbf16>
    %50 = vector.extract_strided_slice %32 {offsets = [0, 16], sizes = [5, 16], strides = [1, 1]} : vector<5x96xbf16> to vector<5x16xbf16>
    %51 = vector.extract_strided_slice %32 {offsets = [0, 48], sizes = [5, 16], strides = [1, 1]} : vector<5x96xbf16> to vector<5x16xbf16>
    %52 = vector.extract_strided_slice %32 {offsets = [0, 80], sizes = [5, 16], strides = [1, 1]} : vector<5x96xbf16> to vector<5x16xbf16>
    %cst_19 = arith.constant dense<0.000000e+00> : vector<5x5xf32>
    %53 = tpu.matmul %50, %51, %cst_19 {dimension_numbers = #tpu.dot_dimension_numbers<[1], [1], [0], [0], [0, 0, 1, 0], [], []>} : vector<5x16xbf16>, vector<5x16xbf16>, vector<5x5xf32> -> vector<5x5xf32>
    %cst_20 = arith.constant dense<0xFF800000> : vector<5xf32>
    %54 = vector.multi_reduction <maximumf>, %53, %cst_20 [1] : vector<5x5xf32> to vector<5xf32>
    %55 = vector.shape_cast %54 : vector<5xf32> to vector<5x1xf32>
    %56 = vector.broadcast %55 : vector<5x1xf32> to vector<5x5xf32>
    %57 = arith.subf %53, %56 : vector<5x5xf32>
    %58 = math.exp %57 : vector<5x5xf32>
    %cst_21 = arith.constant dense<0.000000e+00> : vector<5xf32>
    %59 = vector.multi_reduction <add>, %58, %cst_21 [1] : vector<5x5xf32> to vector<5xf32>
    %60 = vector.shape_cast %59 : vector<5xf32> to vector<5x1xf32>
    %61 = tpu.reciprocal %60 {approx = true} : vector<5x1xf32> -> vector<5x1xf32>
    %62 = arith.truncf %58 : vector<5x5xf32> to vector<5x5xbf16>
    %cst_22 = arith.constant dense<0.000000e+00> : vector<5x16xf32>
    %63 = tpu.matmul %62, %52, %cst_22 {dimension_numbers = #tpu.dot_dimension_numbers<[1], [0], [0], [1], [0, 0, 1, 1], [], []>} : vector<5x5xbf16>, vector<5x16xbf16>, vector<5x16xf32> -> vector<5x16xf32>
    %64 = vector.broadcast %61 : vector<5x1xf32> to vector<5x16xf32>
    %65 = arith.mulf %63, %64 : vector<5x16xf32>
    %66 = arith.truncf %65 : vector<5x16xf32> to vector<5x16xbf16>
    %67 = tpu.concatenate %49, %66 in 1 : vector<5x16xbf16>, vector<5x16xbf16> -> vector<5x32xbf16>
    %c0_23 = arith.constant 0 : index
    %c0_24 = arith.constant 0 : index
    %68 = vector.load %arg6[%c0_23, %c0_24] : memref<32x32xbf16, #tpu.memory_space<vmem>>, vector<32x32xbf16>
    %cst_25 = arith.constant dense<0.000000e+00> : vector<5x32xf32>
    %69 = tpu.matmul %67, %68, %cst_25 {dimension_numbers = #tpu.dot_dimension_numbers<[1], [0], [0], [1], [0, 0, 1, 1], [], []>} : vector<5x32xbf16>, vector<32x32xbf16>, vector<5x32xf32> -> vector<5x32xf32>
    %70 = arith.addf %1, %69 : vector<5x32xf32>
    %c0_26 = arith.constant 0 : index
    %c0_27 = arith.constant 0 : index
    %71 = vector.load %arg7[%c0_26, %c0_27] : memref<1x32xf32, #tpu.memory_space<vmem>>, vector<1x32xf32>
    %72 = vector.broadcast %71 : vector<1x32xf32> to vector<5x32xf32>
    %73 = arith.addf %70, %72 : vector<5x32xf32>
    %c0_28 = arith.constant 0 : index
    %c0_29 = arith.constant 0 : index
    %c0_30 = arith.constant 0 : index
    %74 = vector.load %arg8[%c0_28, %c0_29, %c0_30] : memref<1x5x32xf32, #tpu.memory_space<vmem>>, vector<1x5x32xf32>
    %75 = vector.shape_cast %74 : vector<1x5x32xf32> to vector<5x32xf32>
    %76 = vector.shape_cast %73 : vector<5x32xf32> to vector<1x5x32xf32>
    tpu.vector_store %arg8[%c0_28, %c0_29, %c0_30], %76 {strides = array<i32>} : memref<1x5x32xf32, #tpu.memory_space<vmem>>, vector<1x5x32xf32>,
    return
  }
  func.func @transform_0(%arg0: i32) -> (i32, i32, i32) {
    %c0_i32 = arith.constant 0 : i32
    %c0_i32_0 = arith.constant 0 : i32
    %c0_i32_1 = arith.constant 0 : i32
    return %arg0, %c0_i32, %c0_i32_0 : i32, i32, i32
  }
  func.func @transform_1(%arg0: i32) -> (i32, i32) {
    %c0_i32 = arith.constant 0 : i32
    %c0_i32_0 = arith.constant 0 : i32
    %c0_i32_1 = arith.constant 0 : i32
    return %c0_i32, %c0_i32_0 : i32, i32
  }
  func.func @transform_2(%arg0: i32) -> (i32, i32) {
    %c0_i32 = arith.constant 0 : i32
    %c0_i32_0 = arith.constant 0 : i32
    %c0_i32_1 = arith.constant 0 : i32
    return %c0_i32, %c0_i32_0 : i32, i32
  }
  func.func @transform_3(%arg0: i32) -> (i32, i32) {
    %c0_i32 = arith.constant 0 : i32
    %c0_i32_0 = arith.constant 0 : i32
    %c0_i32_1 = arith.constant 0 : i32
    return %c0_i32, %c0_i32_0 : i32, i32
  }
  func.func @transform_4(%arg0: i32) -> (i32, i32) {
    %c0_i32 = arith.constant 0 : i32
    %c0_i32_0 = arith.constant 0 : i32
    %c0_i32_1 = arith.constant 0 : i32
    return %c0_i32, %c0_i32_0 : i32, i32
  }
  func.func @transform_5(%arg0: i32) -> (i32, i32) {
    %c0_i32 = arith.constant 0 : i32
    %c0_i32_0 = arith.constant 0 : i32
    %c0_i32_1 = arith.constant 0 : i32
    return %c0_i32, %c0_i32_0 : i32, i32
  }
  func.func @transform_6(%arg0: i32) -> (i32, i32) {
    %c0_i32 = arith.constant 0 : i32
    %c0_i32_0 = arith.constant 0 : i32
    %c0_i32_1 = arith.constant 0 : i32
    return %c0_i32, %c0_i32_0 : i32, i32
  }
  func.func @transform_7(%arg0: i32) -> (i32, i32, i32) {
    %c0_i32 = arith.constant 0 : i32
    %c0_i32_0 = arith.constant 0 : i32
    %c0_i32_1 = arith.constant 0 : i32
    return %arg0, %c0_i32, %c0_i32_0 : i32, i32, i32
  }
}

module attributes {stable_mosaic.version = 11 : i64} {
  func.func @_mlp_block_kernel(%arg0: i32, %arg1: memref<10x32xf32, #tpu.memory_space<vmem>>, %arg2: memref<1x32xf32, #tpu.memory_space<vmem>>, %arg3: memref<1x32xf32, #tpu.memory_space<vmem>>, %arg4: memref<32x128xbf16, #tpu.memory_space<vmem>>, %arg5: memref<1x128xf32, #tpu.memory_space<vmem>>, %arg6: memref<128x32xbf16, #tpu.memory_space<vmem>>, %arg7: memref<1x32xf32, #tpu.memory_space<vmem>>, %arg8: memref<10x32xf32, #tpu.memory_space<vmem>>) attributes {dimension_semantics = [#tpu.dimension_semantics<parallel>], iteration_bounds = array<i64: 1>, scalar_prefetch = 0 : i64, scratch_operands = 0 : i64, tpu.core_type = #tpu.core_type<tc>, window_params = [{transform_indices = @transform_0, window_bounds = array<i64: 10, 32>}, {pipeline_mode = #tpu.pipeline_mode<synchronous>, transform_indices = @transform_1, window_bounds = array<i64: 1, 32>}, {pipeline_mode = #tpu.pipeline_mode<synchronous>, transform_indices = @transform_2, window_bounds = array<i64: 1, 32>}, {pipeline_mode = #tpu.pipeline_mode<synchronous>, transform_indices = @transform_3, window_bounds = array<i64: 32, 128>}, {pipeline_mode = #tpu.pipeline_mode<synchronous>, transform_indices = @transform_4, window_bounds = array<i64: 1, 128>}, {pipeline_mode = #tpu.pipeline_mode<synchronous>, transform_indices = @transform_5, window_bounds = array<i64: 128, 32>}, {pipeline_mode = #tpu.pipeline_mode<synchronous>, transform_indices = @transform_6, window_bounds = array<i64: 1, 32>}, {transform_indices = @transform_7, window_bounds = array<i64: 10, 32>}]} {
    %c0 = arith.constant 0 : index
    %c0_0 = arith.constant 0 : index
    %0 = vector.load %arg1[%c0, %c0_0] : memref<10x32xf32, #tpu.memory_space<vmem>>, vector<10x32xf32>
    %c0_1 = arith.constant 0 : index
    %c0_2 = arith.constant 0 : index
    %1 = vector.load %arg2[%c0_1, %c0_2] : memref<1x32xf32, #tpu.memory_space<vmem>>, vector<1x32xf32>
    %c0_3 = arith.constant 0 : index
    %c0_4 = arith.constant 0 : index
    %2 = vector.load %arg3[%c0_3, %c0_4] : memref<1x32xf32, #tpu.memory_space<vmem>>, vector<1x32xf32>
    %cst = arith.constant dense<0.000000e+00> : vector<10xf32>
    %3 = vector.multi_reduction <add>, %0, %cst [1] : vector<10x32xf32> to vector<10xf32>
    %4 = vector.shape_cast %3 : vector<10xf32> to vector<10x1xf32>
    %cst_5 = arith.constant 3.200000e+01 : f32
    %5 = vector.broadcast %cst_5 : f32 to vector<10x1xf32>
    %6 = arith.divf %4, %5 : vector<10x1xf32>
    %7 = vector.broadcast %6 : vector<10x1xf32> to vector<10x32xf32>
    %8 = arith.subf %0, %7 : vector<10x32xf32>
    %9 = arith.mulf %8, %8 : vector<10x32xf32>
    %cst_6 = arith.constant dense<0.000000e+00> : vector<10xf32>
    %10 = vector.multi_reduction <add>, %9, %cst_6 [1] : vector<10x32xf32> to vector<10xf32>
    %11 = vector.shape_cast %10 : vector<10xf32> to vector<10x1xf32>
    %cst_7 = arith.constant 3.200000e+01 : f32
    %12 = vector.broadcast %cst_7 : f32 to vector<10x1xf32>
    %13 = arith.divf %11, %12 : vector<10x1xf32>
    %14 = vector.broadcast %6 : vector<10x1xf32> to vector<10x32xf32>
    %15 = arith.subf %0, %14 : vector<10x32xf32>
    %cst_8 = arith.constant 9.99999974E-6 : f32
    %16 = vector.broadcast %cst_8 : f32 to vector<10x1xf32>
    %17 = arith.addf %13, %16 : vector<10x1xf32>
    %18 = math.rsqrt %17 : vector<10x1xf32>
    %19 = vector.broadcast %18 : vector<10x1xf32> to vector<10x32xf32>
    %20 = arith.mulf %15, %19 : vector<10x32xf32>
    %21 = vector.broadcast %1 : vector<1x32xf32> to vector<10x32xf32>
    %22 = arith.mulf %20, %21 : vector<10x32xf32>
    %23 = vector.broadcast %2 : vector<1x32xf32> to vector<10x32xf32>
    %24 = arith.addf %22, %23 : vector<10x32xf32>
    %25 = arith.truncf %24 : vector<10x32xf32> to vector<10x32xbf16>
    %c0_9 = arith.constant 0 : index
    %c0_10 = arith.constant 0 : index
    %26 = vector.load %arg7[%c0_9, %c0_10] : memref<1x32xf32, #tpu.memory_space<vmem>>, vector<1x32xf32>
    %27 = vector.broadcast %26 : vector<1x32xf32> to vector<10x32xf32>
    %28 = arith.addf %0, %27 : vector<10x32xf32>
    %c0_11 = arith.constant 0 : index
    %c0_12 = arith.constant 0 : index
    %29 = vector.load %arg4[%c0_11, %c0_12] : memref<32x128xbf16, #tpu.memory_space<vmem>>, vector<32x128xbf16>
    %cst_13 = arith.constant dense<0.000000e+00> : vector<10x128xf32>
    %30 = tpu.matmul %25, %29, %cst_13 {dimension_numbers = #tpu.dot_dimension_numbers<[1], [0], [0], [1], [0, 0, 1, 1], [], []>} : vector<10x32xbf16>, vector<32x128xbf16>, vector<10x128xf32> -> vector<10x128xf32>
    %c0_14 = arith.constant 0 : index
    %c0_15 = arith.constant 0 : index
    %31 = vector.load %arg5[%c0_14, %c0_15] : memref<1x128xf32, #tpu.memory_space<vmem>>, vector<1x128xf32>
    %32 = vector.broadcast %31 : vector<1x128xf32> to vector<10x128xf32>
    %33 = arith.addf %30, %32 : vector<10x128xf32>
    %cst_16 = arith.constant 5.000000e-01 : f32
    %34 = vector.broadcast %cst_16 : f32 to vector<10x128xf32>
    %35 = arith.mulf %34, %33 : vector<10x128xf32>
    %cst_17 = arith.constant 0.707106769 : f32
    %36 = vector.broadcast %cst_17 : f32 to vector<10x128xf32>
    %37 = arith.mulf %33, %36 : vector<10x128xf32>
    %38 = math.absf %37 : vector<10x128xf32>
    %cst_18 = arith.constant 0.327591091 : f32
    %39 = vector.broadcast %cst_18 : f32 to vector<10x128xf32>
    %40 = arith.mulf %39, %38 : vector<10x128xf32>
    %cst_19 = arith.constant 1.000000e+00 : f32
    %41 = vector.broadcast %cst_19 : f32 to vector<10x128xf32>
    %42 = arith.addf %41, %40 : vector<10x128xf32>
    %cst_20 = arith.constant 1.000000e+00 : f32
    %43 = vector.broadcast %cst_20 : f32 to vector<10x128xf32>
    %44 = arith.divf %43, %42 : vector<10x128xf32>
    %cst_21 = arith.constant 1.06140542 : f32
    %45 = vector.broadcast %cst_21 : f32 to vector<10x128xf32>
    %46 = arith.mulf %45, %44 : vector<10x128xf32>
    %cst_22 = arith.constant -1.45315206 : f32
    %47 = vector.broadcast %cst_22 : f32 to vector<10x128xf32>
    %48 = arith.addf %46, %47 : vector<10x128xf32>
    %49 = arith.mulf %48, %44 : vector<10x128xf32>
    %cst_23 = arith.constant 1.42141378 : f32
    %50 = vector.broadcast %cst_23 : f32 to vector<10x128xf32>
    %51 = arith.addf %49, %50 : vector<10x128xf32>
    %52 = arith.mulf %51, %44 : vector<10x128xf32>
    %cst_24 = arith.constant -0.284496725 : f32
    %53 = vector.broadcast %cst_24 : f32 to vector<10x128xf32>
    %54 = arith.addf %52, %53 : vector<10x128xf32>
    %55 = arith.mulf %54, %44 : vector<10x128xf32>
    %cst_25 = arith.constant 0.254829586 : f32
    %56 = vector.broadcast %cst_25 : f32 to vector<10x128xf32>
    %57 = arith.addf %55, %56 : vector<10x128xf32>
    %58 = arith.mulf %57, %44 : vector<10x128xf32>
    %cst_26 = arith.constant 0.000000e+00 : f32
    %59 = vector.broadcast %cst_26 : f32 to vector<10x128xf32>
    %60 = arith.subf %59, %38 : vector<10x128xf32>
    %61 = arith.mulf %60, %38 : vector<10x128xf32>
    %62 = math.exp %61 : vector<10x128xf32>
    %63 = arith.mulf %58, %62 : vector<10x128xf32>
    %cst_27 = arith.constant 1.000000e+00 : f32
    %64 = vector.broadcast %cst_27 : f32 to vector<10x128xf32>
    %65 = arith.subf %64, %63 : vector<10x128xf32>
    %cst_28 = arith.constant 0.000000e+00 : f32
    %66 = vector.broadcast %cst_28 : f32 to vector<10x128xf32>
    %67 = arith.cmpf olt, %37, %66 : vector<10x128xf32>
    %cst_29 = arith.constant 0.000000e+00 : f32
    %68 = vector.broadcast %cst_29 : f32 to vector<10x128xf32>
    %69 = arith.subf %68, %65 : vector<10x128xf32>
    %70 = arith.select %67, %69, %65 : vector<10x128xi1>, vector<10x128xf32>
    %cst_30 = arith.constant 1.000000e+00 : f32
    %71 = vector.broadcast %cst_30 : f32 to vector<10x128xf32>
    %72 = arith.addf %71, %70 : vector<10x128xf32>
    %73 = arith.mulf %35, %72 : vector<10x128xf32>
    %74 = arith.truncf %73 : vector<10x128xf32> to vector<10x128xbf16>
    %c0_31 = arith.constant 0 : index
    %c0_32 = arith.constant 0 : index
    %75 = vector.load %arg6[%c0_31, %c0_32] : memref<128x32xbf16, #tpu.memory_space<vmem>>, vector<128x32xbf16>
    %cst_33 = arith.constant dense<0.000000e+00> : vector<10x32xf32>
    %76 = tpu.matmul %74, %75, %cst_33 {dimension_numbers = #tpu.dot_dimension_numbers<[1], [0], [0], [1], [0, 0, 1, 1], [], []>} : vector<10x128xbf16>, vector<128x32xbf16>, vector<10x32xf32> -> vector<10x32xf32>
    %77 = arith.addf %28, %76 : vector<10x32xf32>
    %c0_34 = arith.constant 0 : index
    %c0_35 = arith.constant 0 : index
    %78 = vector.load %arg8[%c0_34, %c0_35] : memref<10x32xf32, #tpu.memory_space<vmem>>, vector<10x32xf32>
    tpu.vector_store %arg8[%c0_34, %c0_35], %77 {strides = array<i32>} : memref<10x32xf32, #tpu.memory_space<vmem>>, vector<10x32xf32>,
    return
  }
  func.func @transform_0(%arg0: i32) -> (i32, i32) {
    %c0_i32 = arith.constant 0 : i32
    %c0_i32_0 = arith.constant 0 : i32
    return %arg0, %c0_i32 : i32, i32
  }
  func.func @transform_1(%arg0: i32) -> (i32, i32) {
    %c0_i32 = arith.constant 0 : i32
    %c0_i32_0 = arith.constant 0 : i32
    %c0_i32_1 = arith.constant 0 : i32
    return %c0_i32, %c0_i32_0 : i32, i32
  }
  func.func @transform_2(%arg0: i32) -> (i32, i32) {
    %c0_i32 = arith.constant 0 : i32
    %c0_i32_0 = arith.constant 0 : i32
    %c0_i32_1 = arith.constant 0 : i32
    return %c0_i32, %c0_i32_0 : i32, i32
  }
  func.func @transform_3(%arg0: i32) -> (i32, i32) {
    %c0_i32 = arith.constant 0 : i32
    %c0_i32_0 = arith.constant 0 : i32
    %c0_i32_1 = arith.constant 0 : i32
    return %c0_i32, %c0_i32_0 : i32, i32
  }
  func.func @transform_4(%arg0: i32) -> (i32, i32) {
    %c0_i32 = arith.constant 0 : i32
    %c0_i32_0 = arith.constant 0 : i32
    %c0_i32_1 = arith.constant 0 : i32
    return %c0_i32, %c0_i32_0 : i32, i32
  }
  func.func @transform_5(%arg0: i32) -> (i32, i32) {
    %c0_i32 = arith.constant 0 : i32
    %c0_i32_0 = arith.constant 0 : i32
    %c0_i32_1 = arith.constant 0 : i32
    return %c0_i32, %c0_i32_0 : i32, i32
  }
  func.func @transform_6(%arg0: i32) -> (i32, i32) {
    %c0_i32 = arith.constant 0 : i32
    %c0_i32_0 = arith.constant 0 : i32
    %c0_i32_1 = arith.constant 0 : i32
    return %c0_i32, %c0_i32_0 : i32, i32
  }
  func.func @transform_7(%arg0: i32) -> (i32, i32) {
    %c0_i32 = arith.constant 0 : i32
    %c0_i32_0 = arith.constant 0 : i32
    return %arg0, %c0_i32 : i32, i32
  }
}

module attributes {stable_mosaic.version = 11 : i64} {
  func.func @_ln_proj_kernel(%arg0: memref<2x32xf32, #tpu.memory_space<vmem>>, %arg1: memref<1x32xf32, #tpu.memory_space<vmem>>, %arg2: memref<1x32xf32, #tpu.memory_space<vmem>>, %arg3: memref<32x16xbf16, #tpu.memory_space<vmem>>, %arg4: memref<2x16xf32, #tpu.memory_space<vmem>>) attributes {dimension_semantics = [], scalar_prefetch = 0 : i64, scratch_operands = 0 : i64, tpu.core_type = #tpu.core_type<tc>} {
    %c0 = arith.constant 0 : index
    %c0_0 = arith.constant 0 : index
    %0 = vector.load %arg0[%c0, %c0_0] : memref<2x32xf32, #tpu.memory_space<vmem>>, vector<2x32xf32>
    %c0_1 = arith.constant 0 : index
    %c0_2 = arith.constant 0 : index
    %1 = vector.load %arg1[%c0_1, %c0_2] : memref<1x32xf32, #tpu.memory_space<vmem>>, vector<1x32xf32>
    %c0_3 = arith.constant 0 : index
    %c0_4 = arith.constant 0 : index
    %2 = vector.load %arg2[%c0_3, %c0_4] : memref<1x32xf32, #tpu.memory_space<vmem>>, vector<1x32xf32>
    %cst = arith.constant dense<0.000000e+00> : vector<2xf32>
    %3 = vector.multi_reduction <add>, %0, %cst [1] : vector<2x32xf32> to vector<2xf32>
    %4 = vector.shape_cast %3 : vector<2xf32> to vector<2x1xf32>
    %cst_5 = arith.constant 3.200000e+01 : f32
    %5 = vector.broadcast %cst_5 : f32 to vector<2x1xf32>
    %6 = arith.divf %4, %5 : vector<2x1xf32>
    %7 = vector.broadcast %6 : vector<2x1xf32> to vector<2x32xf32>
    %8 = arith.subf %0, %7 : vector<2x32xf32>
    %9 = arith.mulf %8, %8 : vector<2x32xf32>
    %cst_6 = arith.constant dense<0.000000e+00> : vector<2xf32>
    %10 = vector.multi_reduction <add>, %9, %cst_6 [1] : vector<2x32xf32> to vector<2xf32>
    %11 = vector.shape_cast %10 : vector<2xf32> to vector<2x1xf32>
    %cst_7 = arith.constant 3.200000e+01 : f32
    %12 = vector.broadcast %cst_7 : f32 to vector<2x1xf32>
    %13 = arith.divf %11, %12 : vector<2x1xf32>
    %14 = vector.broadcast %6 : vector<2x1xf32> to vector<2x32xf32>
    %15 = arith.subf %0, %14 : vector<2x32xf32>
    %cst_8 = arith.constant 9.99999974E-6 : f32
    %16 = vector.broadcast %cst_8 : f32 to vector<2x1xf32>
    %17 = arith.addf %13, %16 : vector<2x1xf32>
    %18 = math.rsqrt %17 : vector<2x1xf32>
    %19 = vector.broadcast %18 : vector<2x1xf32> to vector<2x32xf32>
    %20 = arith.mulf %15, %19 : vector<2x32xf32>
    %21 = vector.broadcast %1 : vector<1x32xf32> to vector<2x32xf32>
    %22 = arith.mulf %20, %21 : vector<2x32xf32>
    %23 = vector.broadcast %2 : vector<1x32xf32> to vector<2x32xf32>
    %24 = arith.addf %22, %23 : vector<2x32xf32>
    %25 = arith.truncf %24 : vector<2x32xf32> to vector<2x32xbf16>
    %c0_9 = arith.constant 0 : index
    %c0_10 = arith.constant 0 : index
    %26 = vector.load %arg3[%c0_9, %c0_10] : memref<32x16xbf16, #tpu.memory_space<vmem>>, vector<32x16xbf16>
    %cst_11 = arith.constant dense<0.000000e+00> : vector<2x16xf32>
    %27 = tpu.matmul %25, %26, %cst_11 {dimension_numbers = #tpu.dot_dimension_numbers<[1], [0], [0], [1], [0, 0, 1, 1], [], []>} : vector<2x32xbf16>, vector<32x16xbf16>, vector<2x16xf32> -> vector<2x16xf32>
    %c0_12 = arith.constant 0 : index
    %c0_13 = arith.constant 0 : index
    %28 = vector.load %arg4[%c0_12, %c0_13] : memref<2x16xf32, #tpu.memory_space<vmem>>, vector<2x16xf32>
    tpu.vector_store %arg4[%c0_12, %c0_13], %27 {strides = array<i32>} : memref<2x16xf32, #tpu.memory_space<vmem>>, vector<2x16xf32>,
    return
  }
}

</mosaic_0001>

<llo_original>
// kernel: clip_vision_forward.11
$region0: #{clip_vision_forward.11}
  #allocation0 [shape = 'u32[]', space=smem, size = 0x4, offset = 0x4, fixed_abs, tag = 'smem constant byte address 0x4 - core index']
  #allocation1 [shape = 'u32[144,128]{1,0:T(1,128)}', space=vmem, size = 0x12000, scoped, tag = 'internal scratch']
  %s0 = inlined_call_operand.vmem [shape: f32[2,32], index: 0, kind: input, shape index: {}]
  %s1 = inlined_call_operand.vmem [shape: f32[1,32], index: 1, kind: input, shape index: {}]
  %s2 = inlined_call_operand.vmem [shape: f32[1,32], index: 2, kind: input, shape index: {}]
  %s3 = inlined_call_operand.vmem [shape: bf16[32,16], index: 3, kind: input, shape index: {}]
  %s4 = inlined_call_operand.hbm [shape: f32[2,16], index: 4, kind: output, shape index: {}]
  %s5 = sld [smem:[#allocation0]]
  $region26: #{clip_vision_forward.11} parent=0
    _
  %s7 = ssub.s32 1, %s5
  %s8 = scalar_select 0, %s7, %s5
  $region1: #{clip_vision_forward.11} parent=0
    #allocation2 [shape = 'u8[1024]{0}', space=vmem, size = 0x400, scoped, tag = 'output window, operand 0, single buffered']
    #allocation3 [shape = 's32[1]{0}', space=sflag, size = 0x4, scoped, tag = 'scoped memory for clip_vision_forward.11']
    %9 = vsyncpa [#allocation3], 0
    // Predicated region
    $region2: #{clip_vision_forward.11} parent=1 // pred_check
      _
    $region3: #{clip_vision_forward.11} parent=1 // pred_check_branch
      %11 = sbr.rel (0) target = $region5
    $region4: #{clip_vision_forward.11} parent=1 // pred_region
      _
    $region5: #{clip_vision_forward.11} parent=1 // pred_fallthru
      _
    // Predicated region
    $region6: #{clip_vision_forward.11} parent=1 // pred_check
      _
    $region7: #{clip_vision_forward.11} parent=1 // pred_check_branch
      %13 = sbr.rel (0) target = $region9
    $region8: #{clip_vision_forward.11} parent=1 // pred_region
      _
    $region9: #{clip_vision_forward.11} parent=1 // pred_fallthru
      _
    // Predicated region
    $region10: #{clip_vision_forward.11} parent=1 // pred_check
      _
    $region11: #{clip_vision_forward.11} parent=1 // pred_check_branch
      %15 = sbr.rel (0) target = $region13
    $region12: #{clip_vision_forward.11} parent=1 // pred_region
      _
    $region13: #{clip_vision_forward.11} parent=1 // pred_fallthru
      _
    // Predicated region
    $region14: #{clip_vision_forward.11} parent=1 // pred_check
      _
    $region15: #{clip_vision_forward.11} parent=1 // pred_check_branch
      %17 = sbr.rel (0) target = $region17
    $region16: #{clip_vision_forward.11} parent=1 // pred_region
      _
    $region17: #{clip_vision_forward.11} parent=1 // pred_fallthru
      _
    %v19 = vld [vmem:[%s0] sm:$0x3]
    %v20 = vld [vmem:[%s1] sm:$0x1]
    %v21 = vld [vmem:[%s2] sm:$0x1]
    %vm22 = vcmask 254976
    %v23 = vsel %vm22, %v19, 0.0
    %24 = vadd.xlane.f32.xlu0 %v23
    %v25 = vpop.xlane.xlu0 %24
    %v26 = vrcp.pop 32.0
    %v27 = vmul.f32 %v25, %v26
    %v28 = vsub.f32 %v19, %v27
    %v29 = vmul.f32 %v28, %v28
    %v30 = vsel %vm22, %v29, 0.0
    %31 = vadd.xlane.f32.xlu0 %v30
    %v32 = vpop.xlane.xlu0 %31
    %v33 = vmul.f32 %v32, %v26
    %v34 = vadd.f32 %v33, 1e-05
    %v35 = vrsqrt.pop %v34
    %v36 = vmul.f32 %v28, %v35
    %v38 = vlaneseq
    %v39 = vshrl.u32 %v38, 7
    %v40 = vsub.s32 0, %v39
    %v41 = vrot.slane %v20, %v40
    %v43 = vmul.f32 %v36, %v41
    %v45 = vlaneseq
    %v46 = vshrl.u32 %v45, 7
    %v47 = vsub.s32 0, %v46
    %v48 = vrot.slane %v21, %v47
    %v50 = vadd.f32 %v43, %v48
    %v51 = vpack.c.bf16 %v50, %v50
    %v52 = vld [vmem:[%s3] sm:$0xf]
    %v53 = vld [vmem:[%s3 + $0x4] sm:$0xf]
    %v54 = vld [vmem:[%s3 + $0x8] sm:$0xf]
    %v55 = vld [vmem:[%s3 + $0xc] sm:$0xf]
    %v60 = vunpack.c.l.b16 %v52
    %v61 = vunpack.c.l.b16 %v53
    %v62 = vunpack.c.l.b16 %v54
    %v63 = vunpack.c.l.b16 %v55
    %v64 = vpack.c.b16 %v61, %v60
    %v65 = vpack.c.b16 %v63, %v62
    %vm68 = vcmask 261120
    %v70 = vsel %vm68, %v51, 0
    %72 = vmatprep.subr.bf16.mxu0 0
    %73 = vmatpush1.bf16.msra.mxu0 %v64
    %74 = vmatprep.subr.bf16.mxu0 0
    %75 = vmatpush1.bf16.msra.mxu0 %v65
    %76 = vmatprep.subr.bf16.mxu0 0
    %77 = vmatpush1.bf16.msra.mxu0 0
    %78 = vmatprep.subr.bf16.mxu0 0
    %79 = vmatpush1.bf16.msra.mxu0 0
    %80 = vmatprep.subr.bf16.mxu0 0
    %81 = vmatpush1.bf16.msra.mxu0 0
    %82 = vmatprep.subr.bf16.mxu0 0
    %83 = vmatpush1.bf16.msra.mxu0 0
    %84 = vmatprep.subr.bf16.mxu0 0
    %85 = vmatpush1.bf16.msra.mxu0 0
    %86 = vmatprep.subr.bf16.mxu0 0
    %87 = vmatpush1.bf16.msra.mxu0 0
    %88 = vmatprep.subr.bf16.mxu0 0
    %89 = vmatpush1.bf16.msra.mxu0 0
    %90 = vmatprep.subr.bf16.mxu0 0
    %91 = vmatpush1.bf16.msra.mxu0 0
    %92 = vmatprep.subr.bf16.mxu0 0
    %93 = vmatpush1.bf16.msra.mxu0 0
    %94 = vmatprep.subr.bf16.mxu0 0
    %95 = vmatpush1.bf16.msra.mxu0 0
    %96 = vmatprep.subr.bf16.mxu0 0
    %97 = vmatpush1.bf16.msra.mxu0 0
    %98 = vmatprep.subr.bf16.mxu0 0
    %99 = vmatpush1.bf16.msra.mxu0 0
    %100 = vmatprep.subr.bf16.mxu0 0
    %101 = vmatpush1.bf16.msra.mxu0 0
    %102 = vmatprep.subr.bf16.mxu0 0
    %103 = vmatpush1.bf16.msra.mxu0 0
    %104 = vmatprep.mubr.bf16.mxu0 0
    %105 = vmatmul.mubr.bf16.gmra.mrb[0].mxu0 %v70
    %v106 = vpop.f32.mrb[0].mxu0
    %v107 = vadd.f32 0.0, %v106
    %v108 = vpop.f32.mrb[0].mxu0
    %v109 = vpop.f32.mrb[0].mxu0
    %v110 = vpop.f32.mrb[0].mxu0
    %111 = vdwg.mxu0
    %vm112 = vcmask 123904
    %113 = vst.msk [vmem:[#allocation2] sm:$0x3] %vm112, %v107
    // Predicated region
    $region18: #{clip_vision_forward.11} parent=1 // pred_check
      _
    $region19: #{clip_vision_forward.11} parent=1 // pred_check_branch
      %115 = sbr.rel (0) target = $region21
    $region20: #{clip_vision_forward.11} parent=1 // pred_region
      %s117 = ssub.s32 32, 32
      %118 = vsyncadd [#allocation3], %s117
      %s120 = sshll.u32 [#allocation2], 4
      %s121 = int_to_ptr.vmem [resolvable:$true] %s120
      %123 = dma.vmem_to_hbm [thread:$0]  %s121, 32, %s4, [#allocation3]
    $region21: #{clip_vision_forward.11} parent=1 // pred_fallthru
      _
    // Predicated region
    $region22: #{clip_vision_forward.11} parent=1 // pred_check
      _
    $region23: #{clip_vision_forward.11} parent=1 // pred_check_branch
      %125 = sbr.rel (0) target = $region25
    $region24: #{clip_vision_forward.11} parent=1 // pred_region
      %126 = dma.done [#allocation3], 32
    $region25: #{clip_vision_forward.11} parent=1 // pred_fallthru
      _
    %127 = vsyncpa [#allocation3], 1

// kernel: clip_vision_forward.6
$region0: #{clip_vision_forward.6}
  #allocation0 [shape = 'u32[]', space=smem, size = 0x4, offset = 0x4, fixed_abs, tag = 'smem constant byte address 0x4 - core index']
  #allocation1 [shape = 'u32[144,128]{1,0:T(1,128)}', space=vmem, size = 0x12000, scoped, tag = 'internal scratch']
  %s0 = inlined_call_operand.vmem [shape: bf16[2,4,192], index: 0, kind: input, shape index: {}]
  %s1 = inlined_call_operand.vmem [shape: bf16[192,32], index: 1, kind: input, shape index: {}]
  %s2 = inlined_call_operand.vmem [shape: f32[1,32], index: 2, kind: input, shape index: {}]
  %s3 = inlined_call_operand.vmem [shape: f32[5,32], index: 3, kind: input, shape index: {}]
  %s4 = inlined_call_operand.vmem [shape: f32[1,32], index: 4, kind: input, shape index: {}]
  %s5 = inlined_call_operand.vmem [shape: f32[1,32], index: 5, kind: input, shape index: {}]
  %s6 = inlined_call_operand.vmem [shape: f32[2,5,32], index: 6, kind: output, shape index: {}]
  %s7 = sld [smem:[#allocation0]]
  $region57: #{clip_vision_forward.6} parent=0
    _
  %s9 = ssub.s32 1, %s7
  %s10 = scalar_select 0, %s9, %s7
  loop: start=0, step=1, limit=4
  $region2: #{clip_vision_forward.6} parent=0 // loop_pre_header
    _
  $region3: #{clip_vision_forward.6} parent=0 // loop_header
    %s12 = sphi 0, %s16
    %p13 = scmp.ge.s32.totalorder %s12, 4
    %s22 = sphi 0, %s24
    %s25 = sphi 0, %s22
    %s26 = sphi 0, %s25
    %s42 = sphi 0, %s26
    %s46 = sphi 0, %s46
    %s48 = sphi 0, %s46
    %s49 = sphi 0, %s48
    %s63 = sphi 0, %s49
    %s67 = sphi 0, %s67
    %s69 = sphi 0, %s67
    %s70 = sphi 0, %s69
    %s84 = sphi 0, %s70
    %s88 = sphi 0, %s88
    %s90 = sphi 0, %s88
    %s91 = sphi 0, %s90
    %s105 = sphi 0, %s91
    %s109 = sphi 0, %s109
    %s111 = sphi 0, %s109
    %s112 = sphi 0, %s111
    %s126 = sphi 0, %s112
    %s130 = sphi 0, %s130
    %s132 = sphi 0, %s130
    %s133 = sphi 0, %s132
    %s147 = sphi 0, %s133
    %s153 = sphi 0, %s155
    %s156 = sphi 0, %s153
    %s157 = sphi 0, %s156
    %s173 = sphi 0, %s157
  $region4: #{clip_vision_forward.6} parent=0 // loop_header_branch
    %15 = sbr.rel (%p13) target = $region8
  $region5: #{clip_vision_forward.6} parent=0 // loop_body
    %s17 = ssub.s32 %s12, 1
    %s18 = ssub.s32 %s12, 2
    %s19 = sadd.s32 %s12, 1
    %s20 = ssub.s32 %s12, %s19
    %p21 = scmp.eq.s32.totalorder %s20, 0
    %s23 = sadd.s32 %s22, 1
    %s24 = scalar_select %p21, %s22, %s23
    %p27 = pneg %p21
    %p28 = scmp.eq.s32.totalorder %s12, 1
    %p29 = por %p27, %p28
    %p30 = scmp.ne.s32.totalorder %s22, %s25
    %p31 = scmp.eq.s32.totalorder %s12, 0
    %p32 = por %p30, %p31
    %p33 = scmp.ne.s32.totalorder %s22, %s25
    %p34 = scmp.eq.s32.totalorder %s17, 1
    %p35 = por %p33, %p34
    %p36 = scmp.ne.s32.totalorder %s25, %s26
    %p37 = scmp.eq.s32.totalorder %s17, 0
    %p38 = por %p36, %p37
    %p39 = scmp.ne.s32.totalorder %s25, %s26
    %p40 = scmp.eq.s32.totalorder %s18, 1
    %p41 = por %p39, %p40
    %p43 = scmp.ne.s32.totalorder %s26, %s42
    %p44 = scmp.eq.s32.totalorder %s18, 0
    %p45 = por %p43, %p44
    %s47 = sadd.s32 %s46, 1
    %p50 = scmp.eq.s32.totalorder %s12, 1
    %p51 = scmp.ne.s32.totalorder %s46, %s48
    %p52 = scmp.eq.s32.totalorder %s12, 0
    %p53 = por %p51, %p52
    %p54 = scmp.ne.s32.totalorder %s46, %s48
    %p55 = scmp.eq.s32.totalorder %s17, 1
    %p56 = por %p54, %p55
    %p57 = scmp.ne.s32.totalorder %s48, %s49
    %p58 = scmp.eq.s32.totalorder %s17, 0
    %p59 = por %p57, %p58
    %p60 = scmp.ne.s32.totalorder %s48, %s49
    %p61 = scmp.eq.s32.totalorder %s18, 1
    %p62 = por %p60, %p61
    %p64 = scmp.ne.s32.totalorder %s49, %s63
    %p65 = scmp.eq.s32.totalorder %s18, 0
    %p66 = por %p64, %p65
    %s68 = sadd.s32 %s67, 1
    %p71 = scmp.eq.s32.totalorder %s12, 1
    %p72 = scmp.ne.s32.totalorder %s67, %s69
    %p73 = scmp.eq.s32.totalorder %s12, 0
    %p74 = por %p72, %p73
    %p75 = scmp.ne.s32.totalorder %s67, %s69
    %p76 = scmp.eq.s32.totalorder %s17, 1
    %p77 = por %p75, %p76
    %p78 = scmp.ne.s32.totalorder %s69, %s70
    %p79 = scmp.eq.s32.totalorder %s17, 0
    %p80 = por %p78, %p79
    %p81 = scmp.ne.s32.totalorder %s69, %s70
    %p82 = scmp.eq.s32.totalorder %s18, 1
    %p83 = por %p81, %p82
    %p85 = scmp.ne.s32.totalorder %s70, %s84
    %p86 = scmp.eq.s32.totalorder %s18, 0
    %p87 = por %p85, %p86
    %s89 = sadd.s32 %s88, 1
    %p92 = scmp.eq.s32.totalorder %s12, 1
    %p93 = scmp.ne.s32.totalorder %s88, %s90
    %p94 = scmp.eq.s32.totalorder %s12, 0
    %p95 = por %p93, %p94
    %p96 = scmp.ne.s32.totalorder %s88, %s90
    %p97 = scmp.eq.s32.totalorder %s17, 1
    %p98 = por %p96, %p97
    %p99 = scmp.ne.s32.totalorder %s90, %s91
    %p100 = scmp.eq.s32.totalorder %s17, 0
    %p101 = por %p99, %p100
    %p102 = scmp.ne.s32.totalorder %s90, %s91
    %p103 = scmp.eq.s32.totalorder %s18, 1
    %p104 = por %p102, %p103
    %p106 = scmp.ne.s32.totalorder %s91, %s105
    %p107 = scmp.eq.s32.totalorder %s18, 0
    %p108 = por %p106, %p107
    %s110 = sadd.s32 %s109, 1
    %p113 = scmp.eq.s32.totalorder %s12, 1
    %p114 = scmp.ne.s32.totalorder %s109, %s111
    %p115 = scmp.eq.s32.totalorder %s12, 0
    %p116 = por %p114, %p115
    %p117 = scmp.ne.s32.totalorder %s109, %s111
    %p118 = scmp.eq.s32.totalorder %s17, 1
    %p119 = por %p117, %p118
    %p120 = scmp.ne.s32.totalorder %s111, %s112
    %p121 = scmp.eq.s32.totalorder %s17, 0
    %p122 = por %p120, %p121
    %p123 = scmp.ne.s32.totalorder %s111, %s112
    %p124 = scmp.eq.s32.totalorder %s18, 1
    %p125 = por %p123, %p124
    %p127 = scmp.ne.s32.totalorder %s112, %s126
    %p128 = scmp.eq.s32.totalorder %s18, 0
    %p129 = por %p127, %p128
    %s131 = sadd.s32 %s130, 1
    %p134 = scmp.eq.s32.totalorder %s12, 1
    %p135 = scmp.ne.s32.totalorder %s130, %s132
    %p136 = scmp.eq.s32.totalorder %s12, 0
    %p137 = por %p135, %p136
    %p138 = scmp.ne.s32.totalorder %s130, %s132
    %p139 = scmp.eq.s32.totalorder %s17, 1
    %p140 = por %p138, %p139
    %p141 = scmp.ne.s32.totalorder %s132, %s133
    %p142 = scmp.eq.s32.totalorder %s17, 0
    %p143 = por %p141, %p142
    %p144 = scmp.ne.s32.totalorder %s132, %s133
    %p145 = scmp.eq.s32.totalorder %s18, 1
    %p146 = por %p144, %p145
    %p148 = scmp.ne.s32.totalorder %s133, %s147
    %p149 = scmp.eq.s32.totalorder %s18, 0
    %p150 = por %p148, %p149
    %s151 = ssub.s32 %s12, %s19
    %p152 = scmp.eq.s32.totalorder %s151, 0
    %s154 = sadd.s32 %s153, 1
    %s155 = scalar_select %p152, %s153, %s154
    %p158 = pneg %p152
    %p159 = scmp.eq.s32.totalorder %s12, 1
    %p160 = por %p158, %p159
    %p161 = scmp.ne.s32.totalorder %s153, %s156
    %p162 = scmp.eq.s32.totalorder %s12, 0
    %p163 = por %p161, %p162
    %p164 = scmp.ne.s32.totalorder %s153, %s156
    %p165 = scmp.eq.s32.totalorder %s17, 1
    %p166 = por %p164, %p165
    %p167 = scmp.ne.s32.totalorder %s156, %s157
    %p168 = scmp.eq.s32.totalorder %s17, 0
    %p169 = por %p167, %p168
    %p170 = scmp.ne.s32.totalorder %s156, %s157
    %p171 = scmp.eq.s32.totalorder %s18, 1
    %p172 = por %p170, %p171
    %p174 = scmp.ne.s32.totalorder %s157, %s173
    %p175 = scmp.eq.s32.totalorder %s18, 0
    %p176 = por %p174, %p175
    %p177 = scmp.le.s32.totalorder 1, %s12
    %p178 = scmp.lt.s32.totalorder %s12, 3
    %p179 = pnand %p177, %p178
    %p180 = pneg %p179
    // Predicated region
    $region9: #{clip_vision_forward.6} parent=5 // pred_check
      _
    $region10: #{clip_vision_forward.6} parent=5 // pred_check_branch
      %182 = sbr.rel (%p179) target = $region12
    $region11: #{clip_vision_forward.6} parent=5 // pred_region
      %s183 = ssub.s32 %s12, 1
      // Predicated region
      $region13: #{clip_vision_forward.6} parent=11 // pred_check
        %p184 = pneg %p59
      $region14: #{clip_vision_forward.6} parent=11 // pred_check_branch
        %186 = sbr.rel (%p184) target = $region16
      $region15: #{clip_vision_forward.6} parent=11 // pred_region
        _
      $region16: #{clip_vision_forward.6} parent=11 // pred_fallthru
        _
      // Predicated region
      $region17: #{clip_vision_forward.6} parent=11 // pred_check
        %p187 = pneg %p80
      $region18: #{clip_vision_forward.6} parent=11 // pred_check_branch
        %189 = sbr.rel (%p187) target = $region20
      $region19: #{clip_vision_forward.6} parent=11 // pred_region
        _
      $region20: #{clip_vision_forward.6} parent=11 // pred_fallthru
        _
      // Predicated region
      $region21: #{clip_vision_forward.6} parent=11 // pred_check
        %p190 = pneg %p101
      $region22: #{clip_vision_forward.6} parent=11 // pred_check_branch
        %192 = sbr.rel (%p190) target = $region24
      $region23: #{clip_vision_forward.6} parent=11 // pred_region
        _
      $region24: #{clip_vision_forward.6} parent=11 // pred_fallthru
        _
      // Predicated region
      $region25: #{clip_vision_forward.6} parent=11 // pred_check
        %p193 = pneg %p122
      $region26: #{clip_vision_forward.6} parent=11 // pred_check_branch
        %195 = sbr.rel (%p193) target = $region28
      $region27: #{clip_vision_forward.6} parent=11 // pred_region
        _
      $region28: #{clip_vision_forward.6} parent=11 // pred_fallthru
        _
      // Predicated region
      $region29: #{clip_vision_forward.6} parent=11 // pred_check
        %p196 = pneg %p143
      $region30: #{clip_vision_forward.6} parent=11 // pred_check_branch
        %198 = sbr.rel (%p196) target = $region32
      $region31: #{clip_vision_forward.6} parent=11 // pred_region
        _
      $region32: #{clip_vision_forward.6} parent=11 // pred_fallthru
        _
    $region12: #{clip_vision_forward.6} parent=5 // pred_fallthru
      _
    %p199 = scmp.lt.s32.totalorder %s12, 2
    // Predicated region
    $region33: #{clip_vision_forward.6} parent=5 // pred_check
      %p200 = pneg %p199
    $region34: #{clip_vision_forward.6} parent=5 // pred_check_branch
      %202 = sbr.rel (%p200) target = $region36
    $region35: #{clip_vision_forward.6} parent=5 // pred_region
      // Predicated region
      $region37: #{clip_vision_forward.6} parent=35 // pred_check
        %p203 = pneg %p32
      $region38: #{clip_vision_forward.6} parent=35 // pred_check_branch
        %205 = sbr.rel (%p203) target = $region40
      $region39: #{clip_vision_forward.6} parent=35 // pred_region
        %p206 = scmp.lt.s32.totalorder %s12, 1
        %s207 = scalar_select %p206, %s12, 1
        %s208 = smul.addr %s207, 2
        %s209 = smul.addr %s208, 2
        %s210 = scalar_lea.vmem %s0, %s209
      $region40: #{clip_vision_forward.6} parent=35 // pred_fallthru
        _
    $region36: #{clip_vision_forward.6} parent=5 // pred_fallthru
      _
    %p211 = scmp.le.s32.totalorder 1, %s12
    %p212 = scmp.lt.s32.totalorder %s12, 3
    %p213 = pnand %p211, %p212
    %p214 = pneg %p213
    // Predicated region
    $region41: #{clip_vision_forward.6} parent=5 // pred_check
      _
    $region42: #{clip_vision_forward.6} parent=5 // pred_check_branch
      %216 = sbr.rel (%p213) target = $region44
    $region43: #{clip_vision_forward.6} parent=5 // pred_region
      %s217 = ssub.s32 %s12, 1
      %p218 = scmp.lt.s32.totalorder %s17, 1
      %s219 = scalar_select %p218, %s17, 1
      %s220 = smul.addr %s219, 2
      %s221 = smul.addr %s220, 2
      %s222 = scalar_lea.vmem %s0, %s221
      %p223 = pneg %p38
      %p224 = pneg %p35
      %p225 = pneg %p59
      %p226 = pneg %p56
      %p227 = pneg %p80
      %p228 = pneg %p77
      %p229 = pneg %p101
      %p230 = pneg %p98
      %p231 = pneg %p122
      %p232 = pneg %p119
      %p233 = pneg %p143
      %p234 = pneg %p140
      %p235 = pneg %p169
      %p236 = pneg %p166
      %p237 = scmp.lt.s32.totalorder %s17, 1
      %s238 = scalar_select %p237, %s17, 1
      %s239 = smul.addr %s238, 8
      %s240 = scalar_lea.vmem %s6, %s239
      %p241 = scmp.lt.s32.totalorder %s17, 1
      %s242 = scalar_select %p241, %s17, 1
      %s243 = smul.addr %s242, 2
      %s244 = smul.addr %s243, 2
      %s245 = scalar_lea.vmem %s0, %s244
      %p246 = scmp.lt.s32.totalorder %s17, 1
      %s247 = scalar_select %p246, %s17, 1
      %s248 = smul.addr %s247, 8
      %s249 = scalar_lea.vmem %s6, %s248
      %v251 = vld [vmem:[%s245] sm:$0xf]
      %v252 = vld [vmem:[%s1] sm:$0xf]
      %v253 = vld [vmem:[%s1 + $0x4] sm:$0xf]
      %v254 = vld [vmem:[%s1 + $0x8] sm:$0xf]
      %v255 = vld [vmem:[%s1 + $0xc] sm:$0xf]
      %v256 = vld [vmem:[%s1 + $0x10] sm:$0xf]
      %v257 = vld [vmem:[%s1 + $0x14] sm:$0xf]
      %v258 = vld [vmem:[%s1 + $0x18] sm:$0xf]
      %v259 = vld [vmem:[%s1 + $0x1c] sm:$0xf]
      %v260 = vld [vmem:[%s1 + $0x20] sm:$0xf]
      %v261 = vld [vmem:[%s1 + $0x24] sm:$0xf]
      %v262 = vld [vmem:[%s1 + $0x28] sm:$0xf]
      %v263 = vld [vmem:[%s1 + $0x2c] sm:$0xf]
      %v264 = vld [vmem:[%s1 + $0x30] sm:$0xf]
      %v265 = vld [vmem:[%s1 + $0x34] sm:$0xf]
      %v266 = vld [vmem:[%s1 + $0x38] sm:$0xf]
      %v267 = vld [vmem:[%s1 + $0x3c] sm:$0xf]
      %v268 = vld [vmem:[%s1 + $0x40] sm:$0xf]
      %v269 = vld [vmem:[%s1 + $0x44] sm:$0xf]
      %v270 = vld [vmem:[%s1 + $0x48] sm:$0xf]
      %v271 = vld [vmem:[%s1 + $0x4c] sm:$0xf]
      %v272 = vld [vmem:[%s1 + $0x50] sm:$0xf]
      %v273 = vld [vmem:[%s1 + $0x54] sm:$0xf]
      %v274 = vld [vmem:[%s1 + $0x58] sm:$0xf]
      %v275 = vld [vmem:[%s1 + $0x5c] sm:$0xf]
      %v278 = vunpack.c.l.s4 1983009808
      %v279 = vunpack.c.0.s8 %v278
      %v280 = vlaneseq
      %v281 = vshrl.u32 %v280, 7
      %v282 = vsub.s32 %v279, %v281
      %v283 = vrot.slane %v251, %v282
      %v284 = vcombine.high %v283, %v283
      %v310 = vunpack.c.l.b16 %v252
      %v311 = vunpack.c.l.b16 %v253
      %v312 = vunpack.c.l.b16 %v254
      %v313 = vunpack.c.l.b16 %v255
      %v314 = vunpack.c.l.b16 %v256
      %v315 = vunpack.c.l.b16 %v257
      %v316 = vunpack.c.l.b16 %v258
      %v317 = vunpack.c.l.b16 %v259
      %v318 = vunpack.c.l.b16 %v260
      %v319 = vunpack.c.l.b16 %v261
      %v320 = vunpack.c.l.b16 %v262
      %v321 = vunpack.c.l.b16 %v263
      %v322 = vunpack.c.l.b16 %v264
      %v323 = vunpack.c.l.b16 %v265
      %v324 = vunpack.c.l.b16 %v266
      %v325 = vunpack.c.l.b16 %v267
      %v326 = vunpack.c.l.b16 %v268
      %v327 = vunpack.c.l.b16 %v269
      %v328 = vunpack.c.l.b16 %v270
      %v329 = vunpack.c.l.b16 %v271
      %v330 = vunpack.c.l.b16 %v272
      %v331 = vunpack.c.l.b16 %v273
      %v332 = vunpack.c.l.b16 %v274
      %v333 = vunpack.c.l.b16 %v275
      %v334 = vpack.c.b16 %v311, %v310
      %v335 = vpack.c.b16 %v313, %v312
      %v336 = vpack.c.b16 %v315, %v314
      %v337 = vpack.c.b16 %v317, %v316
      %v338 = vpack.c.b16 %v319, %v318
      %v339 = vpack.c.b16 %v321, %v320
      %v340 = vpack.c.b16 %v323, %v322
      %v341 = vpack.c.b16 %v325, %v324
      %v342 = vpack.c.b16 %v327, %v326
      %v343 = vpack.c.b16 %v329, %v328
      %v344 = vpack.c.b16 %v331, %v330
      %v345 = vpack.c.b16 %v333, %v332
      %vm358 = vcmask 523264
      %v360 = vsel %vm358, %v284, 0
      %362 = vmatprep.subr.bf16.mxu0 0
      %363 = vmatpush1.bf16.msra.mxu0 %v334
      %364 = vmatprep.subr.bf16.mxu0 0
      %365 = vmatpush1.bf16.msra.mxu0 %v335
      %366 = vmatprep.subr.bf16.mxu0 0
      %367 = vmatpush1.bf16.msra.mxu0 %v336
      %368 = vmatprep.subr.bf16.mxu0 0
      %369 = vmatpush1.bf16.msra.mxu0 %v337
      %370 = vmatprep.subr.bf16.mxu0 0
      %371 = vmatpush1.bf16.msra.mxu0 %v338
      %372 = vmatprep.subr.bf16.mxu0 0
      %373 = vmatpush1.bf16.msra.mxu0 %v339
      %374 = vmatprep.subr.bf16.mxu0 0
      %375 = vmatpush1.bf16.msra.mxu0 %v340
      %376 = vmatprep.subr.bf16.mxu0 0
      %377 = vmatpush1.bf16.msra.mxu0 %v341
      %378 = vmatprep.subr.bf16.mxu0 0
      %379 = vmatpush1.bf16.msra.mxu0 %v342
      %380 = vmatprep.subr.bf16.mxu0 0
      %381 = vmatpush1.bf16.msra.mxu0 %v343
      %382 = vmatprep.subr.bf16.mxu0 0
      %383 = vmatpush1.bf16.msra.mxu0 %v344
      %384 = vmatprep.subr.bf16.mxu0 0
      %385 = vmatpush1.bf16.msra.mxu0 %v345
      %386 = vmatprep.subr.bf16.mxu0 0
      %387 = vmatpush1.bf16.msra.mxu0 0
      %388 = vmatprep.subr.bf16.mxu0 0
      %389 = vmatpush1.bf16.msra.mxu0 0
      %390 = vmatprep.subr.bf16.mxu0 0
      %391 = vmatpush1.bf16.msra.mxu0 0
      %392 = vmatprep.subr.bf16.mxu0 0
      %393 = vmatpush1.bf16.msra.mxu0 0
      %394 = vmatprep.mubr.bf16.mxu0 %v360
      %395 = vmatmul.mubr.bf16.gmra.mrb[0].mxu0 %v283
      %v396 = vpop.f32.mrb[0].mxu0
      %v397 = vadd.f32 0.0, %v396
      %v398 = vpop.f32.mrb[0].mxu0
      %v399 = vpop.f32.mrb[0].mxu0
      %v400 = vpop.f32.mrb[0].mxu0
      %401 = vdwg.mxu0
      %v402 = vld [vmem:[%s2] sm:$0x1]
      %v404 = vrot.slane %v397, 7
      %vm406 = vcmask 1040384
      %v407 = vsel %vm406, %v402, %v404
      %v408 = vld [vmem:[%s3] sm:$0x1f]
      %v409 = vadd.f32 %v407, %v408
      %v410 = vld [vmem:[%s4] sm:$0x1]
      %v411 = vld [vmem:[%s5] sm:$0x1]
      %vm412 = vcmask 258048
      %v413 = vsel %vm412, %v409, 0.0
      %414 = vadd.xlane.f32.xlu0 %v413
      %v415 = vpop.xlane.xlu0 %414
      %v416 = vrcp.pop 32.0
      %v417 = vmul.f32 %v415, %v416
      %v418 = vsub.f32 %v409, %v417
      %v419 = vmul.f32 %v418, %v418
      %v420 = vsel %vm412, %v419, 0.0
      %421 = vadd.xlane.f32.xlu0 %v420
      %v422 = vpop.xlane.xlu0 %421
      %v423 = vmul.f32 %v422, %v416
      %v424 = vadd.f32 %v423, 1e-05
      %v425 = vrsqrt.pop %v424
      %v426 = vmul.f32 %v418, %v425
      %v428 = vlaneseq
      %v429 = vshrl.u32 %v428, 7
      %v430 = vsub.s32 0, %v429
      %v431 = vrot.slane %v410, %v430
      %v433 = vmul.f32 %v426, %v431
      %v435 = vlaneseq
      %v436 = vshrl.u32 %v435, 7
      %v437 = vsub.s32 0, %v436
      %v438 = vrot.slane %v411, %v437
      %v440 = vadd.f32 %v433, %v438
      %441 = vst.msk [vmem:[%s249] sm:$0x1f] %vm412, %v440
      %p442 = scmp.lt.s32.totalorder %s17, 1
      %s443 = scalar_select %p442, %s17, 1
      %s444 = smul.addr %s443, 8
      %s445 = scalar_lea.vmem %s6, %s444
      // Predicated region
      $region45: #{clip_vision_forward.6} parent=43 // pred_check
        %p446 = pneg %p166
      $region46: #{clip_vision_forward.6} parent=43 // pred_check_branch
        %448 = sbr.rel (%p446) target = $region48
      $region47: #{clip_vision_forward.6} parent=43 // pred_region
        _
      $region48: #{clip_vision_forward.6} parent=43 // pred_fallthru
        _
    $region44: #{clip_vision_forward.6} parent=5 // pred_fallthru
      _
    %p449 = scmp.le.s32.totalorder 2, %s12
    // Predicated region
    $region49: #{clip_vision_forward.6} parent=5 // pred_check
      %p450 = pneg %p449
    $region50: #{clip_vision_forward.6} parent=5 // pred_check_branch
      %452 = sbr.rel (%p450) target = $region52
    $region51: #{clip_vision_forward.6} parent=5 // pred_region
      %s453 = ssub.s32 %s12, 2
      // Predicated region
      $region53: #{clip_vision_forward.6} parent=51 // pred_check
        %p454 = pneg %p172
      $region54: #{clip_vision_forward.6} parent=51 // pred_check_branch
        %456 = sbr.rel (%p454) target = $region56
      $region55: #{clip_vision_forward.6} parent=51 // pred_region
        %p457 = scmp.lt.s32.totalorder %s18, 1
        %s458 = scalar_select %p457, %s18, 1
        %s459 = smul.addr %s458, 8
        %s460 = scalar_lea.vmem %s6, %s459
      $region56: #{clip_vision_forward.6} parent=51 // pred_fallthru
        _
    $region52: #{clip_vision_forward.6} parent=5 // pred_fallthru
      _
  $region6: #{clip_vision_forward.6} parent=0 // loop_footer
    %s16 = sadd.s32 1, %s12
  $region7: #{clip_vision_forward.6} parent=0 // loop_footer_branch
    %11 = sbr.rel target = $region3
  $region8: #{clip_vision_forward.6} parent=0 // loop_exit
    _

// kernel: clip_vision_forward.7
$region0: #{clip_vision_forward.7}
  #allocation0 [shape = 'u32[]', space=smem, size = 0x4, offset = 0x4, fixed_abs, tag = 'smem constant byte address 0x4 - core index']
  #allocation1 [shape = 'u32[144,128]{1,0:T(1,128)}', space=vmem, size = 0x12000, scoped, tag = 'internal scratch']
  %s0 = inlined_call_operand.vmem [shape: f32[2,5,32], index: 0, kind: input, shape index: {}]
  %s1 = inlined_call_operand.vmem [shape: f32[1,32], index: 1, kind: input, shape index: {}]
  %s2 = inlined_call_operand.vmem [shape: f32[1,32], index: 2, kind: input, shape index: {}]
  %s3 = inlined_call_operand.vmem [shape: bf16[32,96], index: 3, kind: input, shape index: {}]
  %s4 = inlined_call_operand.vmem [shape: f32[1,96], index: 4, kind: input, shape index: {}]
  %s5 = inlined_call_operand.vmem [shape: bf16[32,32], index: 5, kind: input, shape index: {}]
  %s6 = inlined_call_operand.vmem [shape: f32[1,32], index: 6, kind: input, shape index: {}]
  %s7 = inlined_call_operand.vmem [shape: f32[2,5,32], index: 7, kind: output, shape index: {}]
  %s8 = sld [smem:[#allocation0]]
  $region61: #{clip_vision_forward.7} parent=0
    _
  %s10 = ssub.s32 1, %s8
  %s11 = scalar_select 0, %s10, %s8
  loop: start=0, step=1, limit=4
  $region2: #{clip_vision_forward.7} parent=0 // loop_pre_header
    _
  $region3: #{clip_vision_forward.7} parent=0 // loop_header
    %s13 = sphi 0, %s17
    %p14 = scmp.ge.s32.totalorder %s13, 4
    %s23 = sphi 0, %s25
    %s26 = sphi 0, %s23
    %s27 = sphi 0, %s26
    %s43 = sphi 0, %s27
    %s47 = sphi 0, %s47
    %s49 = sphi 0, %s47
    %s50 = sphi 0, %s49
    %s64 = sphi 0, %s50
    %s68 = sphi 0, %s68
    %s70 = sphi 0, %s68
    %s71 = sphi 0, %s70
    %s85 = sphi 0, %s71
    %s89 = sphi 0, %s89
    %s91 = sphi 0, %s89
    %s92 = sphi 0, %s91
    %s106 = sphi 0, %s92
    %s110 = sphi 0, %s110
    %s112 = sphi 0, %s110
    %s113 = sphi 0, %s112
    %s127 = sphi 0, %s113
    %s131 = sphi 0, %s131
    %s133 = sphi 0, %s131
    %s134 = sphi 0, %s133
    %s148 = sphi 0, %s134
    %s152 = sphi 0, %s152
    %s154 = sphi 0, %s152
    %s155 = sphi 0, %s154
    %s169 = sphi 0, %s155
    %s175 = sphi 0, %s177
    %s178 = sphi 0, %s175
    %s179 = sphi 0, %s178
    %s195 = sphi 0, %s179
  $region4: #{clip_vision_forward.7} parent=0 // loop_header_branch
    %16 = sbr.rel (%p14) target = $region8
  $region5: #{clip_vision_forward.7} parent=0 // loop_body
    %s18 = ssub.s32 %s13, 1
    %s19 = ssub.s32 %s13, 2
    %s20 = sadd.s32 %s13, 1
    %s21 = ssub.s32 %s13, %s20
    %p22 = scmp.eq.s32.totalorder %s21, 0
    %s24 = sadd.s32 %s23, 1
    %s25 = scalar_select %p22, %s23, %s24
    %p28 = pneg %p22
    %p29 = scmp.eq.s32.totalorder %s13, 1
    %p30 = por %p28, %p29
    %p31 = scmp.ne.s32.totalorder %s23, %s26
    %p32 = scmp.eq.s32.totalorder %s13, 0
    %p33 = por %p31, %p32
    %p34 = scmp.ne.s32.totalorder %s23, %s26
    %p35 = scmp.eq.s32.totalorder %s18, 1
    %p36 = por %p34, %p35
    %p37 = scmp.ne.s32.totalorder %s26, %s27
    %p38 = scmp.eq.s32.totalorder %s18, 0
    %p39 = por %p37, %p38
    %p40 = scmp.ne.s32.totalorder %s26, %s27
    %p41 = scmp.eq.s32.totalorder %s19, 1
    %p42 = por %p40, %p41
    %p44 = scmp.ne.s32.totalorder %s27, %s43
    %p45 = scmp.eq.s32.totalorder %s19, 0
    %p46 = por %p44, %p45
    %s48 = sadd.s32 %s47, 1
    %p51 = scmp.eq.s32.totalorder %s13, 1
    %p52 = scmp.ne.s32.totalorder %s47, %s49
    %p53 = scmp.eq.s32.totalorder %s13, 0
    %p54 = por %p52, %p53
    %p55 = scmp.ne.s32.totalorder %s47, %s49
    %p56 = scmp.eq.s32.totalorder %s18, 1
    %p57 = por %p55, %p56
    %p58 = scmp.ne.s32.totalorder %s49, %s50
    %p59 = scmp.eq.s32.totalorder %s18, 0
    %p60 = por %p58, %p59
    %p61 = scmp.ne.s32.totalorder %s49, %s50
    %p62 = scmp.eq.s32.totalorder %s19, 1
    %p63 = por %p61, %p62
    %p65 = scmp.ne.s32.totalorder %s50, %s64
    %p66 = scmp.eq.s32.totalorder %s19, 0
    %p67 = por %p65, %p66
    %s69 = sadd.s32 %s68, 1
    %p72 = scmp.eq.s32.totalorder %s13, 1
    %p73 = scmp.ne.s32.totalorder %s68, %s70
    %p74 = scmp.eq.s32.totalorder %s13, 0
    %p75 = por %p73, %p74
    %p76 = scmp.ne.s32.totalorder %s68, %s70
    %p77 = scmp.eq.s32.totalorder %s18, 1
    %p78 = por %p76, %p77
    %p79 = scmp.ne.s32.totalorder %s70, %s71
    %p80 = scmp.eq.s32.totalorder %s18, 0
    %p81 = por %p79, %p80
    %p82 = scmp.ne.s32.totalorder %s70, %s71
    %p83 = scmp.eq.s32.totalorder %s19, 1
    %p84 = por %p82, %p83
    %p86 = scmp.ne.s32.totalorder %s71, %s85
    %p87 = scmp.eq.s32.totalorder %s19, 0
    %p88 = por %p86, %p87
    %s90 = sadd.s32 %s89, 1
    %p93 = scmp.eq.s32.totalorder %s13, 1
    %p94 = scmp.ne.s32.totalorder %s89, %s91
    %p95 = scmp.eq.s32.totalorder %s13, 0
    %p96 = por %p94, %p95
    %p97 = scmp.ne.s32.totalorder %s89, %s91
    %p98 = scmp.eq.s32.totalorder %s18, 1
    %p99 = por %p97, %p98
    %p100 = scmp.ne.s32.totalorder %s91, %s92
    %p101 = scmp.eq.s32.totalorder %s18, 0
    %p102 = por %p100, %p101
    %p103 = scmp.ne.s32.totalorder %s91, %s92
    %p104 = scmp.eq.s32.totalorder %s19, 1
    %p105 = por %p103, %p104
    %p107 = scmp.ne.s32.totalorder %s92, %s106
    %p108 = scmp.eq.s32.totalorder %s19, 0
    %p109 = por %p107, %p108
    %s111 = sadd.s32 %s110, 1
    %p114 = scmp.eq.s32.totalorder %s13, 1
    %p115 = scmp.ne.s32.totalorder %s110, %s112
    %p116 = scmp.eq.s32.totalorder %s13, 0
    %p117 = por %p115, %p116
    %p118 = scmp.ne.s32.totalorder %s110, %s112
    %p119 = scmp.eq.s32.totalorder %s18, 1
    %p120 = por %p118, %p119
    %p121 = scmp.ne.s32.totalorder %s112, %s113
    %p122 = scmp.eq.s32.totalorder %s18, 0
    %p123 = por %p121, %p122
    %p124 = scmp.ne.s32.totalorder %s112, %s113
    %p125 = scmp.eq.s32.totalorder %s19, 1
    %p126 = por %p124, %p125
    %p128 = scmp.ne.s32.totalorder %s113, %s127
    %p129 = scmp.eq.s32.totalorder %s19, 0
    %p130 = por %p128, %p129
    %s132 = sadd.s32 %s131, 1
    %p135 = scmp.eq.s32.totalorder %s13, 1
    %p136 = scmp.ne.s32.totalorder %s131, %s133
    %p137 = scmp.eq.s32.totalorder %s13, 0
    %p138 = por %p136, %p137
    %p139 = scmp.ne.s32.totalorder %s131, %s133
    %p140 = scmp.eq.s32.totalorder %s18, 1
    %p141 = por %p139, %p140
    %p142 = scmp.ne.s32.totalorder %s133, %s134
    %p143 = scmp.eq.s32.totalorder %s18, 0
    %p144 = por %p142, %p143
    %p145 = scmp.ne.s32.totalorder %s133, %s134
    %p146 = scmp.eq.s32.totalorder %s19, 1
    %p147 = por %p145, %p146
    %p149 = scmp.ne.s32.totalorder %s134, %s148
    %p150 = scmp.eq.s32.totalorder %s19, 0
    %p151 = por %p149, %p150
    %s153 = sadd.s32 %s152, 1
    %p156 = scmp.eq.s32.totalorder %s13, 1
    %p157 = scmp.ne.s32.totalorder %s152, %s154
    %p158 = scmp.eq.s32.totalorder %s13, 0
    %p159 = por %p157, %p158
    %p160 = scmp.ne.s32.totalorder %s152, %s154
    %p161 = scmp.eq.s32.totalorder %s18, 1
    %p162 = por %p160, %p161
    %p163 = scmp.ne.s32.totalorder %s154, %s155
    %p164 = scmp.eq.s32.totalorder %s18, 0
    %p165 = por %p163, %p164
    %p166 = scmp.ne.s32.totalorder %s154, %s155
    %p167 = scmp.eq.s32.totalorder %s19, 1
    %p168 = por %p166, %p167
    %p170 = scmp.ne.s32.totalorder %s155, %s169
    %p171 = scmp.eq.s32.totalorder %s19, 0
    %p172 = por %p170, %p171
    %s173 = ssub.s32 %s13, %s20
    %p174 = scmp.eq.s32.totalorder %s173, 0
    %s176 = sadd.s32 %s175, 1
    %s177 = scalar_select %p174, %s175, %s176
    %p180 = pneg %p174
    %p181 = scmp.eq.s32.totalorder %s13, 1
    %p182 = por %p180, %p181
    %p183 = scmp.ne.s32.totalorder %s175, %s178
    %p184 = scmp.eq.s32.totalorder %s13, 0
    %p185 = por %p183, %p184
    %p186 = scmp.ne.s32.totalorder %s175, %s178
    %p187 = scmp.eq.s32.totalorder %s18, 1
    %p188 = por %p186, %p187
    %p189 = scmp.ne.s32.totalorder %s178, %s179
    %p190 = scmp.eq.s32.totalorder %s18, 0
    %p191 = por %p189, %p190
    %p192 = scmp.ne.s32.totalorder %s178, %s179
    %p193 = scmp.eq.s32.totalorder %s19, 1
    %p194 = por %p192, %p193
    %p196 = scmp.ne.s32.totalorder %s179, %s195
    %p197 = scmp.eq.s32.totalorder %s19, 0
    %p198 = por %p196, %p197
    %p199 = scmp.le.s32.totalorder 1, %s13
    %p200 = scmp.lt.s32.totalorder %s13, 3
    %p201 = pnand %p199, %p200
    %p202 = pneg %p201
    // Predicated region
    $region9: #{clip_vision_forward.7} parent=5 // pred_check
      _
    $region10: #{clip_vision_forward.7} parent=5 // pred_check_branch
      %204 = sbr.rel (%p201) target = $region12
    $region11: #{clip_vision_forward.7} parent=5 // pred_region
      %s205 = ssub.s32 %s13, 1
      // Predicated region
      $region13: #{clip_vision_forward.7} parent=11 // pred_check
        %p206 = pneg %p60
      $region14: #{clip_vision_forward.7} parent=11 // pred_check_branch
        %208 = sbr.rel (%p206) target = $region16
      $region15: #{clip_vision_forward.7} parent=11 // pred_region
        _
      $region16: #{clip_vision_forward.7} parent=11 // pred_fallthru
        _
      // Predicated region
      $region17: #{clip_vision_forward.7} parent=11 // pred_check
        %p209 = pneg %p81
      $region18: #{clip_vision_forward.7} parent=11 // pred_check_branch
        %211 = sbr.rel (%p209) target = $region20
      $region19: #{clip_vision_forward.7} parent=11 // pred_region
        _
      $region20: #{clip_vision_forward.7} parent=11 // pred_fallthru
        _
      // Predicated region
      $region21: #{clip_vision_forward.7} parent=11 // pred_check
        %p212 = pneg %p102
      $region22: #{clip_vision_forward.7} parent=11 // pred_check_branch
        %214 = sbr.rel (%p212) target = $region24
      $region23: #{clip_vision_forward.7} parent=11 // pred_region
        _
      $region24: #{clip_vision_forward.7} parent=11 // pred_fallthru
        _
      // Predicated region
      $region25: #{clip_vision_forward.7} parent=11 // pred_check
        %p215 = pneg %p123
      $region26: #{clip_vision_forward.7} parent=11 // pred_check_branch
        %217 = sbr.rel (%p215) target = $region28
      $region27: #{clip_vision_forward.7} parent=11 // pred_region
        _
      $region28: #{clip_vision_forward.7} parent=11 // pred_fallthru
        _
      // Predicated region
      $region29: #{clip_vision_forward.7} parent=11 // pred_check
        %p218 = pneg %p144
      $region30: #{clip_vision_forward.7} parent=11 // pred_check_branch
        %220 = sbr.rel (%p218) target = $region32
      $region31: #{clip_vision_forward.7} parent=11 // pred_region
        _
      $region32: #{clip_vision_forward.7} parent=11 // pred_fallthru
        _
      // Predicated region
      $region33: #{clip_vision_forward.7} parent=11 // pred_check
        %p221 = pneg %p165
      $region34: #{clip_vision_forward.7} parent=11 // pred_check_branch
        %223 = sbr.rel (%p221) target = $region36
      $region35: #{clip_vision_forward.7} parent=11 // pred_region
        _
      $region36: #{clip_vision_forward.7} parent=11 // pred_fallthru
        _
    $region12: #{clip_vision_forward.7} parent=5 // pred_fallthru
      _
    %p224 = scmp.lt.s32.totalorder %s13, 2
    // Predicated region
    $region37: #{clip_vision_forward.7} parent=5 // pred_check
      %p225 = pneg %p224
    $region38: #{clip_vision_forward.7} parent=5 // pred_check_branch
      %227 = sbr.rel (%p225) target = $region40
    $region39: #{clip_vision_forward.7} parent=5 // pred_region
      // Predicated region
      $region41: #{clip_vision_forward.7} parent=39 // pred_check
        %p228 = pneg %p33
      $region42: #{clip_vision_forward.7} parent=39 // pred_check_branch
        %230 = sbr.rel (%p228) target = $region44
      $region43: #{clip_vision_forward.7} parent=39 // pred_region
        %p231 = scmp.lt.s32.totalorder %s13, 1
        %s232 = scalar_select %p231, %s13, 1
        %s233 = smul.addr %s232, 8
        %s234 = scalar_lea.vmem %s0, %s233
      $region44: #{clip_vision_forward.7} parent=39 // pred_fallthru
        _
    $region40: #{clip_vision_forward.7} parent=5 // pred_fallthru
      _
    %p235 = scmp.le.s32.totalorder 1, %s13
    %p236 = scmp.lt.s32.totalorder %s13, 3
    %p237 = pnand %p235, %p236
    %p238 = pneg %p237
    // Predicated region
    $region45: #{clip_vision_forward.7} parent=5 // pred_check
      _
    $region46: #{clip_vision_forward.7} parent=5 // pred_check_branch
      %240 = sbr.rel (%p237) target = $region48
    $region47: #{clip_vision_forward.7} parent=5 // pred_region
      %s241 = ssub.s32 %s13, 1
      %p242 = scmp.lt.s32.totalorder %s18, 1
      %s243 = scalar_select %p242, %s18, 1
      %s244 = smul.addr %s243, 8
      %s245 = scalar_lea.vmem %s0, %s244
      %p246 = pneg %p39
      %p247 = pneg %p36
      %p248 = pneg %p60
      %p249 = pneg %p57
      %p250 = pneg %p81
      %p251 = pneg %p78
      %p252 = pneg %p102
      %p253 = pneg %p99
      %p254 = pneg %p123
      %p255 = pneg %p120
      %p256 = pneg %p144
      %p257 = pneg %p141
      %p258 = pneg %p165
      %p259 = pneg %p162
      %p260 = pneg %p191
      %p261 = pneg %p188
      %p262 = scmp.lt.s32.totalorder %s18, 1
      %s263 = scalar_select %p262, %s18, 1
      %s264 = smul.addr %s263, 8
      %s265 = scalar_lea.vmem %s7, %s264
      %p266 = scmp.lt.s32.totalorder %s18, 1
      %s267 = scalar_select %p266, %s18, 1
      %s268 = smul.addr %s267, 8
      %s269 = scalar_lea.vmem %s0, %s268
      %p270 = scmp.lt.s32.totalorder %s18, 1
      %s271 = scalar_select %p270, %s18, 1
      %s272 = smul.addr %s271, 8
      %s273 = scalar_lea.vmem %s7, %s272
      %v275 = vld [vmem:[%s269] sm:$0x1f]
      %v276 = vld [vmem:[%s1] sm:$0x1]
      %v277 = vld [vmem:[%s2] sm:$0x1]
      %vm278 = vcmask 258048
      %v279 = vsel %vm278, %v275, 0.0
      %280 = vadd.xlane.f32.xlu0 %v279
      %v281 = vpop.xlane.xlu0 %280
      %v282 = vrcp.pop 32.0
      %v283 = vmul.f32 %v281, %v282
      %v284 = vsub.f32 %v275, %v283
      %v285 = vmul.f32 %v284, %v284
      %v286 = vsel %vm278, %v285, 0.0
      %287 = vadd.xlane.f32.xlu0 %v286
      %v288 = vpop.xlane.xlu0 %287
      %v289 = vmul.f32 %v288, %v282
      %v290 = vadd.f32 %v289, 1e-05
      %v291 = vrsqrt.pop %v290
      %v292 = vmul.f32 %v284, %v291
      %v294 = vlaneseq
      %v295 = vshrl.u32 %v294, 7
      %v296 = vsub.s32 0, %v295
      %v297 = vrot.slane %v276, %v296
      %v299 = vmul.f32 %v292, %v297
      %v301 = vlaneseq
      %v302 = vshrl.u32 %v301, 7
      %v303 = vsub.s32 0, %v302
      %v304 = vrot.slane %v277, %v303
      %v306 = vadd.f32 %v299, %v304
      %v307 = vpack.c.bf16 %v306, %v306
      %v308 = vld [vmem:[%s3] sm:$0xf]
      %v309 = vld [vmem:[%s3 + $0x4] sm:$0xf]
      %v310 = vld [vmem:[%s3 + $0x8] sm:$0xf]
      %v311 = vld [vmem:[%s3 + $0xc] sm:$0xf]
      %v312 = vld [vmem:[%s4] sm:$0x1]
      %v314 = vlaneseq
      %v315 = vshrl.u32 %v314, 7
      %v316 = vsub.s32 0, %v315
      %v317 = vrot.slane %v312, %v316
      %v323 = vunpack.c.l.b16 %v308
      %v324 = vunpack.c.l.b16 %v309
      %v325 = vunpack.c.l.b16 %v310
      %v326 = vunpack.c.l.b16 %v311
      %v327 = vpack.c.b16 %v324, %v323
      %v328 = vpack.c.b16 %v326, %v325
      %vm331 = vcmask 261120
      %v333 = vsel %vm331, %v307, 0
      %335 = vmatprep.subr.bf16.mxu0 0
      %336 = vmatpush1.bf16.msra.mxu0 %v327
      %337 = vmatprep.subr.bf16.mxu0 0
      %338 = vmatpush1.bf16.msra.mxu0 %v328
      %339 = vmatprep.subr.bf16.mxu0 0
      %340 = vmatpush1.bf16.msra.mxu0 0
      %341 = vmatprep.subr.bf16.mxu0 0
      %342 = vmatpush1.bf16.msra.mxu0 0
      %343 = vmatprep.subr.bf16.mxu0 0
      %344 = vmatpush1.bf16.msra.mxu0 0
      %345 = vmatprep.subr.bf16.mxu0 0
      %346 = vmatpush1.bf16.msra.mxu0 0
      %347 = vmatprep.subr.bf16.mxu0 0
      %348 = vmatpush1.bf16.msra.mxu0 0
      %349 = vmatprep.subr.bf16.mxu0 0
      %350 = vmatpush1.bf16.msra.mxu0 0
      %351 = vmatprep.subr.bf16.mxu0 0
      %352 = vmatpush1.bf16.msra.mxu0 0
      %353 = vmatprep.subr.bf16.mxu0 0
      %354 = vmatpush1.bf16.msra.mxu0 0
      %355 = vmatprep.subr.bf16.mxu0 0
      %356 = vmatpush1.bf16.msra.mxu0 0
      %357 = vmatprep.subr.bf16.mxu0 0
      %358 = vmatpush1.bf16.msra.mxu0 0
      %359 = vmatprep.subr.bf16.mxu0 0
      %360 = vmatpush1.bf16.msra.mxu0 0
      %361 = vmatprep.subr.bf16.mxu0 0
      %362 = vmatpush1.bf16.msra.mxu0 0
      %363 = vmatprep.subr.bf16.mxu0 0
      %364 = vmatpush1.bf16.msra.mxu0 0
      %365 = vmatprep.subr.bf16.mxu0 0
      %366 = vmatpush1.bf16.msra.mxu0 0
      %367 = vmatprep.mubr.bf16.mxu0 0
      %368 = vmatmul.mubr.bf16.gmra.mrb[0].mxu0 %v333
      %v369 = vpop.f32.mrb[0].mxu0
      %v370 = vadd.f32 %v317, %v369
      %v371 = vpop.f32.mrb[0].mxu0
      %v372 = vpop.f32.mrb[0].mxu0
      %v373 = vpop.f32.mrb[0].mxu0
      %374 = vdwg.mxu0
      %v375 = vpack.c.bf16 %v370, %v370
      %377 = vrot.lane.b32.xlu0 %v375, 96
      %v378 = vpop.permute.xlu0 %377
      %vm379 = vcmask 130048
      %v381 = vsel %vm379, %v375, 0
      %v384 = vsel %vm379, %v378, 0
      %386 = vmatprep.subr.bf16.mxu0 0
      %387 = vmatpush1.bf16.xpose.msra.mxu0 %v384
      %388 = vmatprep.subr.bf16.mxu0 0
      %389 = vmatpush1.bf16.xpose.msra.mxu0 0
      %390 = vmatprep.subr.bf16.mxu0 0
      %391 = vmatpush1.bf16.xpose.msra.mxu0 0
      %392 = vmatprep.subr.bf16.mxu0 0
      %393 = vmatpush1.bf16.xpose.msra.mxu0 0
      %394 = vmatprep.subr.bf16.mxu0 0
      %395 = vmatpush1.bf16.xpose.msra.mxu0 0
      %396 = vmatprep.subr.bf16.mxu0 0
      %397 = vmatpush1.bf16.xpose.msra.mxu0 0
      %398 = vmatprep.subr.bf16.mxu0 0
      %399 = vmatpush1.bf16.xpose.msra.mxu0 0
      %400 = vmatprep.subr.bf16.mxu0 0
      %401 = vmatpush1.bf16.xpose.msra.mxu0 0
      %402 = vmatprep.subr.bf16.mxu0 0
      %403 = vmatpush1.bf16.xpose.msra.mxu0 0
      %404 = vmatprep.subr.bf16.mxu0 0
      %405 = vmatpush1.bf16.xpose.msra.mxu0 0
      %406 = vmatprep.subr.bf16.mxu0 0
      %407 = vmatpush1.bf16.xpose.msra.mxu0 0
      %408 = vmatprep.subr.bf16.mxu0 0
      %409 = vmatpush1.bf16.xpose.msra.mxu0 0
      %410 = vmatprep.subr.bf16.mxu0 0
      %411 = vmatpush1.bf16.xpose.msra.mxu0 0
      %412 = vmatprep.subr.bf16.mxu0 0
      %413 = vmatpush1.bf16.xpose.msra.mxu0 0
      %414 = vmatprep.subr.bf16.mxu0 0
      %415 = vmatpush1.bf16.xpose.msra.mxu0 0
      %416 = vmatprep.subr.bf16.mxu0 0
      %417 = vmatpush1.bf16.xpose.msra.mxu0 0
      %418 = vmatprep.mubr.bf16.mxu0 0
      %419 = vmatmul.mubr.bf16.gmra.mrb[0].mxu0 %v381
      %v420 = vpop.f32.mrb[0].mxu0
      %v421 = vadd.f32 0.0, %v420
      %v422 = vpop.f32.mrb[0].mxu0
      %v423 = vpop.f32.mrb[0].mxu0
      %v424 = vpop.f32.mrb[0].mxu0
      %425 = vdwg.mxu0
      %vm426 = vcmask 36864
      %v427 = vsel %vm426, %v421, -inf
      %428 = vmax.xlane.f32.xlu0 %v427
      %v429 = vpop.xlane.xlu0 %428
      %v430 = vsub.f32 %v421, %v429
      %v431 = vmul.f32 %v430, 1.442695
      %v432 = vpow.pop %v431
      %v433 = vsel %vm426, %v432, 0.0
      %434 = vadd.xlane.f32.xlu0 %v433
      %v435 = vpop.xlane.xlu0 %434
      %v436 = vrcp.pop %v435
      %v437 = vpack.c.bf16 %v432, %v432
      %438 = vrot.lane.b32.xlu0 %v375, 64
      %v439 = vpop.permute.xlu0 %438
      %vm440 = vcmask 39936
      %v442 = vsel %vm440, %v437, 0
      %vm444 = vcmask 1041408
      %vm445 = vcmask 1042432
      %v446 = vsel %vm444, 4294967295, 65535
      %v447 = vsel %vm445, %v446, 0
      %v449 = vand.u32 %v439, %v447
      %451 = vmatprep.subr.bf16.mxu0 0
      %452 = vmatpush1.bf16.msra.mxu0 %v449
      %453 = vmatprep.subr.bf16.mxu0 0
      %454 = vmatpush1.bf16.msra.mxu0 0
      %455 = vmatprep.subr.bf16.mxu0 0
      %456 = vmatpush1.bf16.msra.mxu0 0
      %457 = vmatprep.subr.bf16.mxu0 0
      %458 = vmatpush1.bf16.msra.mxu0 0
      %459 = vmatprep.subr.bf16.mxu0 0
      %460 = vmatpush1.bf16.msra.mxu0 0
      %461 = vmatprep.subr.bf16.mxu0 0
      %462 = vmatpush1.bf16.msra.mxu0 0
      %463 = vmatprep.subr.bf16.mxu0 0
      %464 = vmatpush1.bf16.msra.mxu0 0
      %465 = vmatprep.subr.bf16.mxu0 0
      %466 = vmatpush1.bf16.msra.mxu0 0
      %467 = vmatprep.subr.bf16.mxu0 0
      %468 = vmatpush1.bf16.msra.mxu0 0
      %469 = vmatprep.subr.bf16.mxu0 0
      %470 = vmatpush1.bf16.msra.mxu0 0
      %471 = vmatprep.subr.bf16.mxu0 0
      %472 = vmatpush1.bf16.msra.mxu0 0
      %473 = vmatprep.subr.bf16.mxu0 0
      %474 = vmatpush1.bf16.msra.mxu0 0
      %475 = vmatprep.subr.bf16.mxu0 0
      %476 = vmatpush1.bf16.msra.mxu0 0
      %477 = vmatprep.subr.bf16.mxu0 0
      %478 = vmatpush1.bf16.msra.mxu0 0
      %479 = vmatprep.subr.bf16.mxu0 0
      %480 = vmatpush1.bf16.msra.mxu0 0
      %481 = vmatprep.subr.bf16.mxu0 0
      %482 = vmatpush1.bf16.msra.mxu0 0
      %483 = vmatprep.mubr.bf16.mxu0 0
      %484 = vmatmul.mubr.bf16.gmra.mrb[0].mxu0 %v442
      %v485 = vpop.f32.mrb[0].mxu0
      %v486 = vadd.f32 0.0, %v485
      %v487 = vpop.f32.mrb[0].mxu0
      %v488 = vpop.f32.mrb[0].mxu0
      %v489 = vpop.f32.mrb[0].mxu0
      %490 = vdwg.mxu0
      %v491 = vmul.f32 %v486, %v436
      %v492 = vpack.c.bf16 %v491, %v491
      %493 = vrot.lane.b32.xlu0 %v375, 112
      %v494 = vpop.permute.xlu0 %493
      %495 = vrot.lane.b32.xlu0 %v375, 80
      %v496 = vpop.permute.xlu0 %495
      %v498 = vsel %vm379, %v494, 0
      %v501 = vsel %vm379, %v496, 0
      %503 = vmatprep.subr.bf16.mxu0 0
      %504 = vmatpush1.bf16.xpose.msra.mxu0 %v501
      %505 = vmatprep.subr.bf16.mxu0 0
      %506 = vmatpush1.bf16.xpose.msra.mxu0 0
      %507 = vmatprep.subr.bf16.mxu0 0
      %508 = vmatpush1.bf16.xpose.msra.mxu0 0
      %509 = vmatprep.subr.bf16.mxu0 0
      %510 = vmatpush1.bf16.xpose.msra.mxu0 0
      %511 = vmatprep.subr.bf16.mxu0 0
      %512 = vmatpush1.bf16.xpose.msra.mxu0 0
      %513 = vmatprep.subr.bf16.mxu0 0
      %514 = vmatpush1.bf16.xpose.msra.mxu0 0
      %515 = vmatprep.subr.bf16.mxu0 0
      %516 = vmatpush1.bf16.xpose.msra.mxu0 0
      %517 = vmatprep.subr.bf16.mxu0 0
      %518 = vmatpush1.bf16.xpose.msra.mxu0 0
      %519 = vmatprep.subr.bf16.mxu0 0
      %520 = vmatpush1.bf16.xpose.msra.mxu0 0
      %521 = vmatprep.subr.bf16.mxu0 0
      %522 = vmatpush1.bf16.xpose.msra.mxu0 0
      %523 = vmatprep.subr.bf16.mxu0 0
      %524 = vmatpush1.bf16.xpose.msra.mxu0 0
      %525 = vmatprep.subr.bf16.mxu0 0
      %526 = vmatpush1.bf16.xpose.msra.mxu0 0
      %527 = vmatprep.subr.bf16.mxu0 0
      %528 = vmatpush1.bf16.xpose.msra.mxu0 0
      %529 = vmatprep.subr.bf16.mxu0 0
      %530 = vmatpush1.bf16.xpose.msra.mxu0 0
      %531 = vmatprep.subr.bf16.mxu0 0
      %532 = vmatpush1.bf16.xpose.msra.mxu0 0
      %533 = vmatprep.subr.bf16.mxu0 0
      %534 = vmatpush1.bf16.xpose.msra.mxu0 0
      %535 = vmatprep.mubr.bf16.mxu0 0
      %536 = vmatmul.mubr.bf16.gmra.mrb[0].mxu0 %v498
      %v537 = vpop.f32.mrb[0].mxu0
      %v538 = vadd.f32 0.0, %v537
      %v539 = vpop.f32.mrb[0].mxu0
      %v540 = vpop.f32.mrb[0].mxu0
      %v541 = vpop.f32.mrb[0].mxu0
      %542 = vdwg.mxu0
      %v543 = vsel %vm426, %v538, -inf
      %544 = vmax.xlane.f32.xlu0 %v543
      %v545 = vpop.xlane.xlu0 %544
      %v546 = vsub.f32 %v538, %v545
      %v547 = vmul.f32 %v546, 1.442695
      %v548 = vpow.pop %v547
      %v549 = vsel %vm426, %v548, 0.0
      %550 = vadd.xlane.f32.xlu0 %v549
      %v551 = vpop.xlane.xlu0 %550
      %v552 = vrcp.pop %v551
      %v553 = vpack.c.bf16 %v548, %v548
      %554 = vrot.lane.b32.xlu0 %v375, 48
      %v555 = vpop.permute.xlu0 %554
      %v557 = vsel %vm440, %v553, 0
      %v560 = vand.u32 %v555, %v447
      %562 = vmatprep.subr.bf16.mxu0 0
      %563 = vmatpush1.bf16.msra.mxu0 %v560
      %564 = vmatprep.subr.bf16.mxu0 0
      %565 = vmatpush1.bf16.msra.mxu0 0
      %566 = vmatprep.subr.bf16.mxu0 0
      %567 = vmatpush1.bf16.msra.mxu0 0
      %568 = vmatprep.subr.bf16.mxu0 0
      %569 = vmatpush1.bf16.msra.mxu0 0
      %570 = vmatprep.subr.bf16.mxu0 0
      %571 = vmatpush1.bf16.msra.mxu0 0
      %572 = vmatprep.subr.bf16.mxu0 0
      %573 = vmatpush1.bf16.msra.mxu0 0
      %574 = vmatprep.subr.bf16.mxu0 0
      %575 = vmatpush1.bf16.msra.mxu0 0
      %576 = vmatprep.subr.bf16.mxu0 0
      %577 = vmatpush1.bf16.msra.mxu0 0
      %578 = vmatprep.subr.bf16.mxu0 0
      %579 = vmatpush1.bf16.msra.mxu0 0
      %580 = vmatprep.subr.bf16.mxu0 0
      %581 = vmatpush1.bf16.msra.mxu0 0
      %582 = vmatprep.subr.bf16.mxu0 0
      %583 = vmatpush1.bf16.msra.mxu0 0
      %584 = vmatprep.subr.bf16.mxu0 0
      %585 = vmatpush1.bf16.msra.mxu0 0
      %586 = vmatprep.subr.bf16.mxu0 0
      %587 = vmatpush1.bf16.msra.mxu0 0
      %588 = vmatprep.subr.bf16.mxu0 0
      %589 = vmatpush1.bf16.msra.mxu0 0
      %590 = vmatprep.subr.bf16.mxu0 0
      %591 = vmatpush1.bf16.msra.mxu0 0
      %592 = vmatprep.subr.bf16.mxu0 0
      %593 = vmatpush1.bf16.msra.mxu0 0
      %594 = vmatprep.mubr.bf16.mxu0 0
      %595 = vmatmul.mubr.bf16.gmra.mrb[0].mxu0 %v557
      %v596 = vpop.f32.mrb[0].mxu0
      %v597 = vadd.f32 0.0, %v596
      %v598 = vpop.f32.mrb[0].mxu0
      %v599 = vpop.f32.mrb[0].mxu0
      %v600 = vpop.f32.mrb[0].mxu0
      %601 = vdwg.mxu0
      %v602 = vmul.f32 %v597, %v552
      %v603 = vpack.c.bf16 %v602, %v602
      %605 = vrot.lane.b32.xlu0 %v603, 16
      %v606 = vpop.permute.xlu0 %605
      %v609 = vsel %vm379, %v492, %v606
      %v610 = vld [vmem:[%s5] sm:$0xf]
      %v611 = vld [vmem:[%s5 + $0x4] sm:$0xf]
      %v612 = vld [vmem:[%s5 + $0x8] sm:$0xf]
      %v613 = vld [vmem:[%s5 + $0xc] sm:$0xf]
      %v618 = vunpack.c.l.b16 %v610
      %v619 = vunpack.c.l.b16 %v611
      %v620 = vunpack.c.l.b16 %v612
      %v621 = vunpack.c.l.b16 %v613
      %v622 = vpack.c.b16 %v619, %v618
      %v623 = vpack.c.b16 %v621, %v620
      %v626 = vsel %vm331, %v609, 0
      %628 = vmatprep.subr.bf16.mxu0 0
      %629 = vmatpush1.bf16.msra.mxu0 %v622
      %630 = vmatprep.subr.bf16.mxu0 0
      %631 = vmatpush1.bf16.msra.mxu0 %v623
      %632 = vmatprep.subr.bf16.mxu0 0
      %633 = vmatpush1.bf16.msra.mxu0 0
      %634 = vmatprep.subr.bf16.mxu0 0
      %635 = vmatpush1.bf16.msra.mxu0 0
      %636 = vmatprep.subr.bf16.mxu0 0
      %637 = vmatpush1.bf16.msra.mxu0 0
      %638 = vmatprep.subr.bf16.mxu0 0
      %639 = vmatpush1.bf16.msra.mxu0 0
      %640 = vmatprep.subr.bf16.mxu0 0
      %641 = vmatpush1.bf16.msra.mxu0 0
      %642 = vmatprep.subr.bf16.mxu0 0
      %643 = vmatpush1.bf16.msra.mxu0 0
      %644 = vmatprep.subr.bf16.mxu0 0
      %645 = vmatpush1.bf16.msra.mxu0 0
      %646 = vmatprep.subr.bf16.mxu0 0
      %647 = vmatpush1.bf16.msra.mxu0 0
      %648 = vmatprep.subr.bf16.mxu0 0
      %649 = vmatpush1.bf16.msra.mxu0 0
      %650 = vmatprep.subr.bf16.mxu0 0
      %651 = vmatpush1.bf16.msra.mxu0 0
      %652 = vmatprep.subr.bf16.mxu0 0
      %653 = vmatpush1.bf16.msra.mxu0 0
      %654 = vmatprep.subr.bf16.mxu0 0
      %655 = vmatpush1.bf16.msra.mxu0 0
      %656 = vmatprep.subr.bf16.mxu0 0
      %657 = vmatpush1.bf16.msra.mxu0 0
      %658 = vmatprep.subr.bf16.mxu0 0
      %659 = vmatpush1.bf16.msra.mxu0 0
      %660 = vmatprep.mubr.bf16.mxu0 0
      %661 = vmatmul.mubr.bf16.gmra.mrb[0].mxu0 %v626
      %v662 = vpop.f32.mrb[0].mxu0
      %v663 = vadd.f32 0.0, %v662
      %v664 = vpop.f32.mrb[0].mxu0
      %v665 = vpop.f32.mrb[0].mxu0
      %v666 = vpop.f32.mrb[0].mxu0
      %667 = vdwg.mxu0
      %v668 = vadd.f32 %v275, %v663
      %v669 = vld [vmem:[%s6] sm:$0x1]
      %v671 = vlaneseq
      %v672 = vshrl.u32 %v671, 7
      %v673 = vsub.s32 0, %v672
      %v674 = vrot.slane %v669, %v673
      %v676 = vadd.f32 %v668, %v674
      %677 = vst.msk [vmem:[%s273] sm:$0x1f] %vm278, %v676
      %p678 = scmp.lt.s32.totalorder %s18, 1
      %s679 = scalar_select %p678, %s18, 1
      %s680 = smul.addr %s679, 8
      %s681 = scalar_lea.vmem %s7, %s680
      // Predicated region
      $region49: #{clip_vision_forward.7} parent=47 // pred_check
        %p682 = pneg %p188
      $region50: #{clip_vision_forward.7} parent=47 // pred_check_branch
        %684 = sbr.rel (%p682) target = $region52
      $region51: #{clip_vision_forward.7} parent=47 // pred_region
        _
      $region52: #{clip_vision_forward.7} parent=47 // pred_fallthru
        _
    $region48: #{clip_vision_forward.7} parent=5 // pred_fallthru
      _
    %p685 = scmp.le.s32.totalorder 2, %s13
    // Predicated region
    $region53: #{clip_vision_forward.7} parent=5 // pred_check
      %p686 = pneg %p685
    $region54: #{clip_vision_forward.7} parent=5 // pred_check_branch
      %688 = sbr.rel (%p686) target = $region56
    $region55: #{clip_vision_forward.7} parent=5 // pred_region
      %s689 = ssub.s32 %s13, 2
      // Predicated region
      $region57: #{clip_vision_forward.7} parent=55 // pred_check
        %p690 = pneg %p194
      $region58: #{clip_vision_forward.7} parent=55 // pred_check_branch
        %692 = sbr.rel (%p690) target = $region60
      $region59: #{clip_vision_forward.7} parent=55 // pred_region
        %p693 = scmp.lt.s32.totalorder %s19, 1
        %s694 = scalar_select %p693, %s19, 1
        %s695 = smul.addr %s694, 8
        %s696 = scalar_lea.vmem %s7, %s695
      $region60: #{clip_vision_forward.7} parent=55 // pred_fallthru
        _
    $region56: #{clip_vision_forward.7} parent=5 // pred_fallthru
      _
  $region6: #{clip_vision_forward.7} parent=0 // loop_footer
    %s17 = sadd.s32 1, %s13
  $region7: #{clip_vision_forward.7} parent=0 // loop_footer_branch
    %12 = sbr.rel target = $region3
  $region8: #{clip_vision_forward.7} parent=0 // loop_exit
    _

// kernel: clip_vision_forward.8
$region0: #{clip_vision_forward.8}
  #allocation0 [shape = 'u32[]', space=smem, size = 0x4, offset = 0x4, fixed_abs, tag = 'smem constant byte address 0x4 - core index']
  #allocation1 [shape = 'u32[144,128]{1,0:T(1,128)}', space=vmem, size = 0x12000, scoped, tag = 'internal scratch']
  %s0 = inlined_call_operand.vmem [shape: f32[10,32], index: 0, kind: input, shape index: {}]
  %s1 = inlined_call_operand.vmem [shape: f32[1,32], index: 1, kind: input, shape index: {}]
  %s2 = inlined_call_operand.vmem [shape: f32[1,32], index: 2, kind: input, shape index: {}]
  %s3 = inlined_call_operand.vmem [shape: bf16[32,128], index: 3, kind: input, shape index: {}]
  %s4 = inlined_call_operand.vmem [shape: f32[1,128], index: 4, kind: input, shape index: {}]
  %s5 = inlined_call_operand.vmem [shape: bf16[128,32], index: 5, kind: input, shape index: {}]
  %s6 = inlined_call_operand.vmem [shape: f32[1,32], index: 6, kind: input, shape index: {}]
  %s7 = inlined_call_operand.vmem [shape: f32[10,32], index: 7, kind: output, shape index: {}]
  %s8 = sld [smem:[#allocation0]]
  $region38: #{clip_vision_forward.8} parent=0
    _
  %s10 = ssub.s32 1, %s8
  %s11 = scalar_select 0, %s10, %s8
  // Predicated region
  $region2: #{clip_vision_forward.8} parent=0 // pred_check
    _
  $region3: #{clip_vision_forward.8} parent=0 // pred_check_branch
    %13 = sbr.rel (0) target = $region5
  $region4: #{clip_vision_forward.8} parent=0 // pred_region
    _
  $region5: #{clip_vision_forward.8} parent=0 // pred_fallthru
    _
  // Predicated region
  $region6: #{clip_vision_forward.8} parent=0 // pred_check
    _
  $region7: #{clip_vision_forward.8} parent=0 // pred_check_branch
    %15 = sbr.rel (0) target = $region9
  $region8: #{clip_vision_forward.8} parent=0 // pred_region
    _
  $region9: #{clip_vision_forward.8} parent=0 // pred_fallthru
    _
  // Predicated region
  $region10: #{clip_vision_forward.8} parent=0 // pred_check
    _
  $region11: #{clip_vision_forward.8} parent=0 // pred_check_branch
    %17 = sbr.rel (0) target = $region13
  $region12: #{clip_vision_forward.8} parent=0 // pred_region
    _
  $region13: #{clip_vision_forward.8} parent=0 // pred_fallthru
    _
  // Predicated region
  $region14: #{clip_vision_forward.8} parent=0 // pred_check
    _
  $region15: #{clip_vision_forward.8} parent=0 // pred_check_branch
    %19 = sbr.rel (0) target = $region17
  $region16: #{clip_vision_forward.8} parent=0 // pred_region
    _
  $region17: #{clip_vision_forward.8} parent=0 // pred_fallthru
    _
  // Predicated region
  $region18: #{clip_vision_forward.8} parent=0 // pred_check
    _
  $region19: #{clip_vision_forward.8} parent=0 // pred_check_branch
    %21 = sbr.rel (0) target = $region21
  $region20: #{clip_vision_forward.8} parent=0 // pred_region
    _
  $region21: #{clip_vision_forward.8} parent=0 // pred_fallthru
    _
  // Predicated region
  $region22: #{clip_vision_forward.8} parent=0 // pred_check
    _
  $region23: #{clip_vision_forward.8} parent=0 // pred_check_branch
    %23 = sbr.rel (0) target = $region25
  $region24: #{clip_vision_forward.8} parent=0 // pred_region
    _
  $region25: #{clip_vision_forward.8} parent=0 // pred_fallthru
    _
  // Predicated region
  $region26: #{clip_vision_forward.8} parent=0 // pred_check
    _
  $region27: #{clip_vision_forward.8} parent=0 // pred_check_branch
    %25 = sbr.rel (0) target = $region29
  $region28: #{clip_vision_forward.8} parent=0 // pred_region
    _
  $region29: #{clip_vision_forward.8} parent=0 // pred_fallthru
    _
  %v27 = vld [vmem:[%s0] sm:$0xff]
  %v28 = vld [vmem:[%s0 + $0x8] sm:$0x3]
  %v29 = vld [vmem:[%s1] sm:$0x1]
  %v30 = vld [vmem:[%s2] sm:$0x1]
  %vm31 = vcmask 261120
  %v32 = vsel %vm31, %v27, 0.0
  %33 = vadd.xlane.f32.xlu0 %v32
  %v34 = vpop.xlane.xlu0 %33
  %vm35 = vcmask 254976
  %v36 = vsel %vm35, %v28, 0.0
  %37 = vadd.xlane.f32.xlu0 %v36
  %v38 = vpop.xlane.xlu0 %37
  %v39 = vrcp.pop 32.0
  %v40 = vmul.f32 %v34, %v39
  %v41 = vmul.f32 %v38, %v39
  %v42 = vsub.f32 %v27, %v40
  %v43 = vsub.f32 %v28, %v41
  %v44 = vmul.f32 %v42, %v42
  %v45 = vmul.f32 %v43, %v43
  %v46 = vsel %vm31, %v44, 0.0
  %47 = vadd.xlane.f32.xlu0 %v46
  %v48 = vpop.xlane.xlu0 %47
  %v49 = vsel %vm35, %v45, 0.0
  %50 = vadd.xlane.f32.xlu0 %v49
  %v51 = vpop.xlane.xlu0 %50
  %v52 = vmul.f32 %v48, %v39
  %v53 = vmul.f32 %v51, %v39
  %v54 = vadd.f32 %v52, 1e-05
  %v55 = vadd.f32 %v53, 1e-05
  %v56 = vrsqrt.pop %v54
  %v57 = vrsqrt.pop %v55
  %v58 = vmul.f32 %v42, %v56
  %v59 = vmul.f32 %v43, %v57
  %v61 = vlaneseq
  %v62 = vshrl.u32 %v61, 7
  %v63 = vsub.s32 0, %v62
  %v64 = vrot.slane %v29, %v63
  %v66 = vmul.f32 %v58, %v64
  %v67 = vmul.f32 %v59, %v64
  %v69 = vlaneseq
  %v70 = vshrl.u32 %v69, 7
  %v71 = vsub.s32 0, %v70
  %v72 = vrot.slane %v30, %v71
  %v74 = vadd.f32 %v66, %v72
  %v75 = vadd.f32 %v67, %v72
  %v76 = vpack.c.bf16 %v75, %v74
  %v77 = vld [vmem:[%s6] sm:$0x1]
  %v79 = vlaneseq
  %v80 = vshrl.u32 %v79, 7
  %v81 = vsub.s32 0, %v80
  %v82 = vrot.slane %v77, %v81
  %v84 = vadd.f32 %v27, %v82
  %v85 = vadd.f32 %v28, %v82
  %v86 = vld [vmem:[%s3] sm:$0xf]
  %v87 = vld [vmem:[%s3 + $0x4] sm:$0xf]
  %v88 = vld [vmem:[%s3 + $0x8] sm:$0xf]
  %v89 = vld [vmem:[%s3 + $0xc] sm:$0xf]
  %v90 = vld [vmem:[%s4] sm:$0x1]
  %v92 = vlaneseq
  %v93 = vshrl.u32 %v92, 7
  %v94 = vsub.s32 0, %v93
  %v95 = vrot.slane %v90, %v94
  %v101 = vunpack.c.l.b16 %v86
  %v102 = vunpack.c.l.b16 %v87
  %v103 = vunpack.c.l.b16 %v88
  %v104 = vunpack.c.l.b16 %v89
  %v105 = vpack.c.b16 %v102, %v101
  %v106 = vpack.c.b16 %v104, %v103
  %v110 = vsel %vm31, %v76, 0
  %112 = vmatprep.subr.bf16.mxu0 0
  %113 = vmatpush1.bf16.msra.mxu0 %v105
  %114 = vmatprep.subr.bf16.mxu0 0
  %115 = vmatpush1.bf16.msra.mxu0 %v106
  %116 = vmatprep.subr.bf16.mxu0 0
  %117 = vmatpush1.bf16.msra.mxu0 0
  %118 = vmatprep.subr.bf16.mxu0 0
  %119 = vmatpush1.bf16.msra.mxu0 0
  %120 = vmatprep.subr.bf16.mxu0 0
  %121 = vmatpush1.bf16.msra.mxu0 0
  %122 = vmatprep.subr.bf16.mxu0 0
  %123 = vmatpush1.bf16.msra.mxu0 0
  %124 = vmatprep.subr.bf16.mxu0 0
  %125 = vmatpush1.bf16.msra.mxu0 0
  %126 = vmatprep.subr.bf16.mxu0 0
  %127 = vmatpush1.bf16.msra.mxu0 0
  %128 = vmatprep.subr.bf16.mxu0 0
  %129 = vmatpush1.bf16.msra.mxu0 0
  %130 = vmatprep.subr.bf16.mxu0 0
  %131 = vmatpush1.bf16.msra.mxu0 0
  %132 = vmatprep.subr.bf16.mxu0 0
  %133 = vmatpush1.bf16.msra.mxu0 0
  %134 = vmatprep.subr.bf16.mxu0 0
  %135 = vmatpush1.bf16.msra.mxu0 0
  %136 = vmatprep.subr.bf16.mxu0 0
  %137 = vmatpush1.bf16.msra.mxu0 0
  %138 = vmatprep.subr.bf16.mxu0 0
  %139 = vmatpush1.bf16.msra.mxu0 0
  %140 = vmatprep.subr.bf16.mxu0 0
  %141 = vmatpush1.bf16.msra.mxu0 0
  %142 = vmatprep.subr.bf16.mxu0 0
  %143 = vmatpush1.bf16.msra.mxu0 0
  %144 = vmatprep.mubr.bf16.mxu0 0
  %145 = vmatmul.mubr.bf16.gmra.mrb[0].mxu0 %v110
  %v146 = vpop.f32.mrb[0].mxu0
  %v147 = vadd.f32 %v95, %v146
  %v148 = vpop.f32.mrb[0].mxu0
  %v149 = vpop.f32.mrb[0].mxu0
  %v150 = vadd.f32 %v95, %v149
  %v151 = vpop.f32.mrb[0].mxu0
  %152 = vdwg.mxu0
  %v153 = vmul.f32 %v147, 0.5
  %v154 = vmul.f32 %v150, 0.5
  %v155 = vmul.f32 %v147, 0.70710677
  %v156 = vmul.f32 %v150, 0.70710677
  %v157 = vand.u32 2147483647, %v155
  %v158 = vand.u32 2147483647, %v156
  %v159 = vmul.f32 %v157, 0.3275911
  %v160 = vmul.f32 %v158, 0.3275911
  %v161 = vadd.f32 %v159, 1.0
  %v162 = vadd.f32 %v160, 1.0
  %v163 = vrcp.pop %v161
  %v164 = vmul.f32 1.0, %v163
  %v165 = vrcp.pop %v162
  %v166 = vmul.f32 1.0, %v165
  %v167 = vmul.f32 %v164, 1.0614054
  %v168 = vmul.f32 %v166, 1.0614054
  %v169 = vadd.f32 %v167, -1.4531521
  %v170 = vadd.f32 %v168, -1.4531521
  %v171 = vmul.f32 %v169, %v164
  %v172 = vmul.f32 %v170, %v166
  %v173 = vadd.f32 %v171, 1.4214138
  %v174 = vadd.f32 %v172, 1.4214138
  %v175 = vmul.f32 %v173, %v164
  %v176 = vmul.f32 %v174, %v166
  %v177 = vadd.f32 %v175, -0.28449672
  %v178 = vadd.f32 %v176, -0.28449672
  %v179 = vmul.f32 %v177, %v164
  %v180 = vmul.f32 %v178, %v166
  %v181 = vadd.f32 %v179, 0.2548296
  %v182 = vadd.f32 %v180, 0.2548296
  %v183 = vmul.f32 %v181, %v164
  %v184 = vmul.f32 %v182, %v166
  %v185 = vsub.f32 0.0, %v157
  %v186 = vsub.f32 0.0, %v158
  %v187 = vmul.f32 %v185, %v157
  %v188 = vmul.f32 %v186, %v158
  %v189 = vmul.f32 %v187, 1.442695
  %v190 = vpow.pop %v189
  %v191 = vmul.f32 %v188, 1.442695
  %v192 = vpow.pop %v191
  %v193 = vmul.f32 %v183, %v190
  %v194 = vmul.f32 %v184, %v192
  %v195 = vsub.f32 1.0, %v193
  %v196 = vsub.f32 1.0, %v194
  %vm197 = vcmp.lt.f32.partialorder %v155, 0.0
  %vm198 = vcmp.lt.f32.partialorder %v156, 0.0
  %v199 = vsub.f32 0.0, %v195
  %v200 = vsub.f32 0.0, %v196
  %v201 = vsel %vm197, %v199, %v195
  %v202 = vsel %vm198, %v200, %v196
  %v203 = vadd.f32 %v201, 1.0
  %v204 = vadd.f32 %v202, 1.0
  %v205 = vmul.f32 %v153, %v203
  %v206 = vmul.f32 %v154, %v204
  %v207 = vpack.c.bf16 %v206, %v205
  %v208 = vld [vmem:[%s5] sm:$0xf]
  %v209 = vld [vmem:[%s5 + $0x4] sm:$0xf]
  %v210 = vld [vmem:[%s5 + $0x8] sm:$0xf]
  %v211 = vld [vmem:[%s5 + $0xc] sm:$0xf]
  %v212 = vld [vmem:[%s5 + $0x10] sm:$0xf]
  %v213 = vld [vmem:[%s5 + $0x14] sm:$0xf]
  %v214 = vld [vmem:[%s5 + $0x18] sm:$0xf]
  %v215 = vld [vmem:[%s5 + $0x1c] sm:$0xf]
  %v216 = vld [vmem:[%s5 + $0x20] sm:$0xf]
  %v217 = vld [vmem:[%s5 + $0x24] sm:$0xf]
  %v218 = vld [vmem:[%s5 + $0x28] sm:$0xf]
  %v219 = vld [vmem:[%s5 + $0x2c] sm:$0xf]
  %v220 = vld [vmem:[%s5 + $0x30] sm:$0xf]
  %v221 = vld [vmem:[%s5 + $0x34] sm:$0xf]
  %v222 = vld [vmem:[%s5 + $0x38] sm:$0xf]
  %v223 = vld [vmem:[%s5 + $0x3c] sm:$0xf]
  %v240 = vunpack.c.l.b16 %v208
  %v241 = vunpack.c.l.b16 %v209
  %v242 = vunpack.c.l.b16 %v210
  %v243 = vunpack.c.l.b16 %v211
  %v244 = vunpack.c.l.b16 %v212
  %v245 = vunpack.c.l.b16 %v213
  %v246 = vunpack.c.l.b16 %v214
  %v247 = vunpack.c.l.b16 %v215
  %v248 = vunpack.c.l.b16 %v216
  %v249 = vunpack.c.l.b16 %v217
  %v250 = vunpack.c.l.b16 %v218
  %v251 = vunpack.c.l.b16 %v219
  %v252 = vunpack.c.l.b16 %v220
  %v253 = vunpack.c.l.b16 %v221
  %v254 = vunpack.c.l.b16 %v222
  %v255 = vunpack.c.l.b16 %v223
  %v256 = vpack.c.b16 %v241, %v240
  %v257 = vpack.c.b16 %v243, %v242
  %v258 = vpack.c.b16 %v245, %v244
  %v259 = vpack.c.b16 %v247, %v246
  %v260 = vpack.c.b16 %v249, %v248
  %v261 = vpack.c.b16 %v251, %v250
  %v262 = vpack.c.b16 %v253, %v252
  %v263 = vpack.c.b16 %v255, %v254
  %272 = vmatprep.subr.bf16.mxu0 0
  %273 = vmatpush1.bf16.msra.mxu0 %v256
  %274 = vmatprep.subr.bf16.mxu0 0
  %275 = vmatpush1.bf16.msra.mxu0 %v257
  %276 = vmatprep.subr.bf16.mxu0 0
  %277 = vmatpush1.bf16.msra.mxu0 %v258
  %278 = vmatprep.subr.bf16.mxu0 0
  %279 = vmatpush1.bf16.msra.mxu0 %v259
  %280 = vmatprep.subr.bf16.mxu0 0
  %281 = vmatpush1.bf16.msra.mxu0 %v260
  %282 = vmatprep.subr.bf16.mxu0 0
  %283 = vmatpush1.bf16.msra.mxu0 %v261
  %284 = vmatprep.subr.bf16.mxu0 0
  %285 = vmatpush1.bf16.msra.mxu0 %v262
  %286 = vmatprep.subr.bf16.mxu0 0
  %287 = vmatpush1.bf16.msra.mxu0 %v263
  %288 = vmatprep.subr.bf16.mxu0 0
  %289 = vmatpush1.bf16.msra.mxu0 0
  %290 = vmatprep.subr.bf16.mxu0 0
  %291 = vmatpush1.bf16.msra.mxu0 0
  %292 = vmatprep.subr.bf16.mxu0 0
  %293 = vmatpush1.bf16.msra.mxu0 0
  %294 = vmatprep.subr.bf16.mxu0 0
  %295 = vmatpush1.bf16.msra.mxu0 0
  %296 = vmatprep.subr.bf16.mxu0 0
  %297 = vmatpush1.bf16.msra.mxu0 0
  %298 = vmatprep.subr.bf16.mxu0 0
  %299 = vmatpush1.bf16.msra.mxu0 0
  %300 = vmatprep.subr.bf16.mxu0 0
  %301 = vmatpush1.bf16.msra.mxu0 0
  %302 = vmatprep.subr.bf16.mxu0 0
  %303 = vmatpush1.bf16.msra.mxu0 0
  %304 = vmatprep.mubr.bf16.mxu0 0
  %305 = vmatmul.mubr.bf16.gmra.mrb[0].mxu0 %v207
  %v306 = vpop.f32.mrb[0].mxu0
  %v307 = vadd.f32 0.0, %v306
  %v308 = vpop.f32.mrb[0].mxu0
  %v309 = vpop.f32.mrb[0].mxu0
  %v310 = vadd.f32 0.0, %v309
  %v311 = vpop.f32.mrb[0].mxu0
  %312 = vdwg.mxu0
  %v313 = vadd.f32 %v84, %v307
  %v314 = vadd.f32 %v85, %v310
  %315 = vst.msk [vmem:[%s7] sm:$0xff] %vm31, %v313
  %316 = vst.msk [vmem:[%s7 + $0x8] sm:$0x3] %vm35, %v314
  // Predicated region
  $region30: #{clip_vision_forward.8} parent=0 // pred_check
    _
  $region31: #{clip_vision_forward.8} parent=0 // pred_check_branch
    %318 = sbr.rel (0) target = $region33
  $region32: #{clip_vision_forward.8} parent=0 // pred_region
    _
  $region33: #{clip_vision_forward.8} parent=0 // pred_fallthru
    _
  // Predicated region
  $region34: #{clip_vision_forward.8} parent=0 // pred_check
    _
  $region35: #{clip_vision_forward.8} parent=0 // pred_check_branch
    %320 = sbr.rel (0) target = $region37
  $region36: #{clip_vision_forward.8} parent=0 // pred_region
    _
  $region37: #{clip_vision_forward.8} parent=0 // pred_fallthru
    _

</llo_original>
